<compile_context>
chip_gen: v6e
topology: v6e:2x2x1
jax: 0.10.0
libtpu: 0.0.40
codegen_flags: <defaults>
</compile_context>

<pallas_src>
import functools

import jax
import jax.numpy as jnp
from jax import lax
from jax.experimental import pallas as pl
from jax.experimental.pallas import tpu as pltpu

BN_EPS = 1e-5


def _round_up(x, m):
    return ((x + m - 1) // m) * m


# ------------------------------------------------------------------ params --
def init_srm_params(key, in_channel):
    """kaiming_normal_(fan_in, relu) conv weights, zero biases, BN gamma=1 /
    beta=0 — matches weight_init() in the PyTorch module."""
    k1, k2 = jax.random.split(key)
    fan_in = in_channel * 9
    std = (2.0 / fan_in) ** 0.5
    w1 = jax.random.normal(k1, (in_channel, in_channel, 3, 3), jnp.float32) * std
    b1 = jnp.zeros((in_channel,), jnp.float32)
    gamma = jnp.ones((in_channel,), jnp.float32)
    beta = jnp.zeros((in_channel,), jnp.float32)
    w2 = jax.random.normal(k2, (2 * in_channel, in_channel, 3, 3),
                           jnp.float32) * std
    b2 = jnp.zeros((2 * in_channel,), jnp.float32)
    return (w1, b1, gamma, beta, w2, b2)


def _num_tensorcores():
    """Best effort: >1 only on megacore-style parts (e.g. v7x); v5e/v6e -> 1."""
    try:
        return max(1, int(getattr(jax.devices()[0], "num_cores", 1) or 1))
    except Exception:  # pragma: no cover - conservative fallback
        return 1


# ----------------------------------------------------------------- forward --
def srm_forward(x_nchw, params, *, tile_m=1024, operand_dtype=jnp.bfloat16,
                num_chunks=None):
    """SRM forward: relu(w * relu(bn1(conv1(x))) + b), (w, b) = split(conv2(out1))."""
    assert tile_m % 128 == 0
    w1, b1, gamma, beta, w2, b2 = params
    N, C, H, W = x_nchw.shape
    f32 = jnp.float32
    cdt = jnp.dtype(operand_dtype)
    tm = tile_m

    # ---------------------------------- geometry ----------------------------
    sub = 8 * (4 // cdt.itemsize)          # sublane pack: 8 (f32) / 16 (bf16)
    Cp = _round_up(C, sub)                 # padded channel count
    Wp = W + 2                             # padded width
    P = (H + 2) * Wp                       # padded pixels per image
    Mp = N * P                             # total padded pixels (canonical frame)
    halo = Wp + 1                          # max |flat 3x3 tap offset|
    halo_al = _round_up(halo, 128)         # lane-aligned DMA halo
    L = _round_up(Mp, tm)                  # canonical frame length
    n_tiles = L // tm
    G = _round_up(halo_al, tm)             # guard width of kernel-1 output frame
    Gb = G // tm
    Lg = L + 2 * G                         # guarded frame length
    win = tm + 2 * halo_al                 # DMA window width (lane multiple)
    offs = tuple((kh - 1) * Wp + (kw - 1) for kh in range(3) for kw in range(3))

    if num_chunks is None:
        cand = _num_tensorcores()
        num_chunks = cand if (cand > 1 and n_tiles % cand == 0) else 1
    if num_chunks < 1 or n_tiles % num_chunks != 0:
        raise ValueError(
            f"num_chunks={num_chunks} must be >=1 and divide n_tiles={n_tiles}")
    t_in = n_tiles // num_chunks

    # -------- layout: NCHW -> channels-major flattened padded frame ---------
    xc = jnp.transpose(x_nchw, (1, 0, 2, 3)).astype(f32)          # (C, N, H, W)
    xp = jnp.pad(xc, ((0, 0), (0, 0), (1, 1), (1, 1)))            # (C, N, H+2, W+2)
    xflat = xp.reshape(C, Mp)
    x_g = jnp.pad(xflat, ((0, Cp - C),
                          (halo_al, halo_al + L - Mp))).astype(cdt)  # (Cp, L+2*halo_al)

    # validity mask over the canonical frame (1 at real output pixels).
    m_idx = jnp.arange(L, dtype=jnp.int32)
    p = m_idx % P
    r = p // Wp
    c = p % Wp
    valid = (m_idx < Mp) & (r >= 1) & (r <= H) & (c >= 1) & (c <= W)
    mask_g = jnp.pad(valid.astype(cdt)[None, :], ((0, 0), (G, G)))   # (1, Lg)

    # -------- weights: (Cout, Cin, 3, 3) -> (Cout_p, 9*Cp), tap-major --------
    def flat_w(wt, cout_p):
        co, ci = wt.shape[0], wt.shape[1]
        w_ = jnp.transpose(wt, (0, 2, 3, 1))                      # (co, 3, 3, ci)
        w_ = jnp.pad(w_, ((0, cout_p - co), (0, 0), (0, 0), (0, Cp - ci)))
        return w_.reshape(cout_p, 9 * Cp).astype(cdt)

    def pad_vec(v, n, fill=0.0):
        return jnp.pad(v.astype(f32), (0, n - v.shape[0]), constant_values=fill)

    w1t = flat_w(w1, Cp)                                          # (Cp, 9Cp)
    b1c = pad_vec(b1, Cp).reshape(Cp, 1)
    # conv2 fused: rows [0,Cp) = "w" half, rows [Cp,2Cp) = "b" half.
    w2t = jnp.concatenate([flat_w(w2[:C], Cp), flat_w(w2[C:], Cp)], 0)  # (2Cp, 9Cp)
    b2c = jnp.concatenate([pad_vec(b2[:C], Cp),
                           pad_vec(b2[C:], Cp)], 0).reshape(2 * Cp, 1)

    # -------------------------- shared kernel helpers -----------------------
    def _dma(src, dst, sem, col0):
        return pltpu.make_async_copy(src.at[:, pl.ds(col0, win)], dst, sem)

    def _window_col(tile, base):
        return pl.multiple_of(tile * tm + base, 128)

    # ------------------------------ kernel 1 --------------------------------
    # conv1 (packed 9-tap matmul) + bias; stores pre-BN activations into the
    # guarded frame and accumulates masked (sum, sumsq) BN partials per chunk.
    def conv1_kernel(x_hbm, w_ref, b_ref, mask_ref,
                     pre_ref, s_ref, ss_ref, buf, pbuf, sem):
        ii = pl.program_id(1)
        tile = pl.program_id(0) * t_in + ii
        slot = ii % 2

        def fetch(t, s):
            _dma(x_hbm, buf.at[s], sem.at[s], _window_col(t, 0)).start()

        @pl.when(ii == 0)               # prime the pipeline at each chunk start
        def _():
            fetch(tile, slot)

        @pl.when(ii + 1 < t_in)         # prefetch next window into other slot
        def _():
            fetch(tile + 1, 1 - slot)

        _dma(x_hbm, buf.at[slot], sem.at[slot], _window_col(tile, 0)).wait()
        window = buf[slot]                                        # (Cp, win) cdt

        for k, off in enumerate(offs):  # pack 9 taps -> one fused matmul
            pbuf[k * Cp:(k + 1) * Cp, :] = window[:, halo_al + off:
                                                  halo_al + off + tm]

        pre = jnp.dot(w_ref[...], pbuf[...],
                      preferred_element_type=jnp.float32) + b_ref[...]
        pre_ref[...] = pre.astype(pre_ref.dtype)

        @pl.when(ii == 0)
        def _():
            s_ref[...] = jnp.zeros_like(s_ref)
            ss_ref[...] = jnp.zeros_like(ss_ref)

        pm = pre * mask_ref[...].astype(jnp.float32)              # masked partials
        s_ref[...] += jnp.sum(pm, axis=1, keepdims=True).reshape(1, Cp, 1)
        ss_ref[...] += jnp.sum(pm * pre, axis=1, keepdims=True).reshape(1, Cp, 1)

    # ------------------------------ kernel 2 --------------------------------
    # Fused BN + ReLU + pad-mask on the halo window, conv2 as one (2Cp, 9Cp)
    # matmul, and relu(w * out1 + b) with w/b as sublane slices of the result.
    def conv2_kernel(y_hbm, m_hbm, w_ref, b_ref, scale_ref, shift_ref,
                     out_ref, abuf, mbuf, pbuf, sem_a, sem_m):
        ii = pl.program_id(1)
        tile = pl.program_id(0) * t_in + ii
        slot = ii % 2
        base = G - halo_al

        def fetch(t, s):
            col = _window_col(t, base)
            _dma(y_hbm, abuf.at[s], sem_a.at[s], col).start()
            _dma(m_hbm, mbuf.at[s], sem_m.at[s], col).start()

        @pl.when(ii == 0)
        def _():
            fetch(tile, slot)

        @pl.when(ii + 1 < t_in)
        def _():
            fetch(tile + 1, 1 - slot)

        col = _window_col(tile, base)
        _dma(y_hbm, abuf.at[slot], sem_a.at[slot], col).wait()
        _dma(m_hbm, mbuf.at[slot], sem_m.at[slot], col).wait()

        pre_w = abuf[slot].astype(jnp.float32)                    # (Cp, win)
        keep = mbuf[slot] > 0.5                                   # (1, win) bool
        bn = jnp.maximum(pre_w * scale_ref[...] + shift_ref[...], 0.0)
        out1_w = jnp.where(keep, bn, 0.0)                         # zero pad/guard
        out1_c = out1_w[:, halo_al:halo_al + tm]                  # center tap, f32
        out1_q = out1_w.astype(cdt)

        for k, off in enumerate(offs):
            pbuf[k * Cp:(k + 1) * Cp, :] = out1_q[:, halo_al + off:
                                                  halo_al + off + tm]

        res = jnp.dot(w_ref[...], pbuf[...],
                      preferred_element_type=jnp.float32) + b_ref[...]  # (2Cp, tm)
        out_ref[...] = jnp.maximum(res[:Cp] * out1_c + res[Cp:], 0.0)

    # ------------------------------ specs / calls ---------------------------
    grid = (num_chunks, t_in)
    col_map = lambda o, i: (0, o * t_in + i)          # canonical-frame blocks
    gcol_map = lambda o, i: (0, o * t_in + i + Gb)    # guarded-frame blocks
    chunk_map = lambda o, i: (o, 0, 0)

    def resident(arr):
        return pl.BlockSpec(arr.shape, lambda o, i: (0, 0))

    cparams = pltpu.CompilerParams(
        dimension_semantics=("parallel", "arbitrary"),
        vmem_limit_bytes=32 * 1024 * 1024)
    dtb = cdt.itemsize

    cost1 = pl.CostEstimate(
        flops=2 * L * 9 * Cp * Cp, transcendentals=0,
        bytes_accessed=n_tiles * win * Cp * dtb + L * Cp * dtb + L * dtb)
    pre_g, sums, sumsqs = pl.pallas_call(
        conv1_kernel,
        out_shape=(jax.ShapeDtypeStruct((Cp, Lg), cdt),
                   jax.ShapeDtypeStruct((num_chunks, Cp, 1), f32),
                   jax.ShapeDtypeStruct((num_chunks, Cp, 1), f32)),
        grid_spec=pltpu.PrefetchScalarGridSpec(
            num_scalar_prefetch=0,
            grid=grid,
            in_specs=[pl.BlockSpec(memory_space=pl.ANY),      # x_g (manual DMA)
                      resident(w1t), resident(b1c),
                      pl.BlockSpec((1, tm), gcol_map)],       # mask tiles
            out_specs=(pl.BlockSpec((Cp, tm), gcol_map),      # guarded pre frame
                       pl.BlockSpec((1, Cp, 1), chunk_map),
                       pl.BlockSpec((1, Cp, 1), chunk_map)),
            scratch_shapes=[pltpu.VMEM((2, Cp, win), cdt),
                            pltpu.VMEM((9 * Cp, tm), cdt),
                            pltpu.SemaphoreType.DMA((2,))]),
        compiler_params=cparams,
        cost_estimate=cost1,
    )(x_g, w1t, b1c, mask_g)

    # ---- tiny BN reduction in XLA: num_chunks partials per channel ----------
    count = float(N * H * W)
    s_tot = jnp.sum(sums, axis=(0, 2))
    ss_tot = jnp.sum(sumsqs, axis=(0, 2))
    mean = s_tot / count
    var = jnp.maximum(ss_tot / count - mean * mean, 0.0)
    scale = pad_vec(gamma, Cp, 1.0) * lax.rsqrt(var + BN_EPS)
    shift = pad_vec(beta, Cp, 0.0) - mean * scale
    scale_c = scale.reshape(Cp, 1)
    shift_c = shift.reshape(Cp, 1)

    cost2 = pl.CostEstimate(
        flops=2 * L * 9 * Cp * (2 * Cp), transcendentals=0,
        bytes_accessed=n_tiles * win * (Cp + 1) * dtb + L * Cp * 4)
    out2 = pl.pallas_call(
        conv2_kernel,
        out_shape=jax.ShapeDtypeStruct((Cp, L), f32),
        grid_spec=pltpu.PrefetchScalarGridSpec(
            num_scalar_prefetch=0,
            grid=grid,
            in_specs=[pl.BlockSpec(memory_space=pl.ANY),      # pre_g (manual DMA)
                      pl.BlockSpec(memory_space=pl.ANY),      # mask_g (manual DMA)
                      resident(w2t), resident(b2c),
                      resident(scale_c), resident(shift_c)],
            out_specs=pl.BlockSpec((Cp, tm), col_map),
            scratch_shapes=[pltpu.VMEM((2, Cp, win), cdt),
                            pltpu.VMEM((2, 1, win), cdt),
                            pltpu.VMEM((9 * Cp, tm), cdt),
                            pltpu.SemaphoreType.DMA((2,)),
                            pltpu.SemaphoreType.DMA((2,))]),
        compiler_params=cparams,
        cost_estimate=cost2,
    )(pre_g, mask_g, w2t, b2c, scale_c, shift_c)

    # -------- back to NCHW: keep only the valid (un-padded) pixels -----------
    out = out2[:C, :Mp].reshape(C, N, H + 2, W + 2)[:, :, 1:H + 1, 1:W + 1]
    return jnp.transpose(out, (1, 0, 2, 3))


# --------------------------------------------------------------- reference --
def _srm_reference(x_nchw, params, operand_dtype=jnp.bfloat16):
    w1, b1, gamma, beta, w2, b2 = params
    C = w1.shape[0]
    f32 = jnp.float32
    cdt = operand_dtype

    def conv(inp, wt, b):
        y = lax.conv_general_dilated(
            inp.astype(cdt), wt.astype(cdt), (1, 1), ((1, 1), (1, 1)),
            dimension_numbers=("NCHW", "OIHW", "NCHW"),
            preferred_element_type=f32)
        return y + b.astype(f32)[None, :, None, None]

    y1 = conv(x_nchw.astype(f32), w1, b1)
    mean = jnp.mean(y1, axis=(0, 2, 3))
    var = jnp.mean((y1 - mean[None, :, None, None]) ** 2, axis=(0, 2, 3))
    scale = gamma * lax.rsqrt(var + BN_EPS)
    shift = beta - mean * scale
    y1q = y1.astype(cdt).astype(f32)          # kernel stores pre in operand dtype
    out1 = jnp.maximum(y1q * scale[None, :, None, None]
                       + shift[None, :, None, None], 0.0)
    y2 = conv(out1, w2, b2)
    w_mod, b_mod = y2[:, :C], y2[:, C:]
    return jnp.maximum(w_mod * out1 + b_mod, 0.0)


# ------------------------------------------------------------------- driver --
if __name__ == "__main__":
    key = jax.random.PRNGKey(0)
    kx, kp = jax.random.split(key)

    N, C, H, W = 2, 4, 16, 16
    x = jax.random.normal(kx, (N, C, H, W), jnp.float32)
    params = init_srm_params(kp, C)

    # f32 MXU operands, small tile -> exercises the multi-tile DMA pipeline.
    fwd_f32 = jax.jit(functools.partial(
        srm_forward, tile_m=256, operand_dtype=jnp.float32))
    out_f32 = jax.block_until_ready(fwd_f32(x, params))
    ref_f32 = _srm_reference(x, params, operand_dtype=jnp.float32)
    assert out_f32.shape == (N, C, H, W)
    assert jnp.allclose(out_f32, ref_f32, atol=1e-3, rtol=1e-3), \
        float(jnp.max(jnp.abs(out_f32 - ref_f32)))

    # bf16 MXU operands at the production tile size, f32 accumulation.
    fwd_bf16 = jax.jit(functools.partial(
        srm_forward, operand_dtype=jnp.bfloat16))
    out_bf16 = jax.block_until_ready(fwd_bf16(x, params))
    ref_bf16 = _srm_reference(x, params, operand_dtype=jnp.bfloat16)
    assert out_bf16.shape == (N, C, H, W)
    assert jnp.allclose(out_bf16, ref_bf16, atol=5e-2, rtol=5e-2), \
        float(jnp.max(jnp.abs(out_bf16 - ref_bf16)))

    print("KERNEL_OK")
</pallas_src>

<mosaic_0001>
module attributes {stable_mosaic.version = 11 : i64} {
  func.func @conv1_kernel(%arg0: i32, %arg1: i32, %arg2: memref<8x1024xf32, #tpu.memory_space<any>>, %arg3: memref<8x72xf32, #tpu.memory_space<vmem>>, %arg4: memref<8x1xf32, #tpu.memory_space<vmem>>, %arg5: memref<1x256xf32, #tpu.memory_space<vmem>>, %arg6: memref<8x256xf32, #tpu.memory_space<vmem>>, %arg7: memref<1x8x1xf32, #tpu.memory_space<vmem>>, %arg8: memref<1x8x1xf32, #tpu.memory_space<vmem>>, %arg9: memref<2x8x512xf32, #tpu.memory_space<vmem>>, %arg10: memref<72x256xf32, #tpu.memory_space<vmem>>, %arg11: memref<2x!tpu.dma_semaphore, #tpu.memory_space<semaphore_mem>>) attributes {dimension_semantics = [#tpu.dimension_semantics<parallel>, #tpu.dimension_semantics<arbitrary>], iteration_bounds = array<i64: 1, 3>, scalar_prefetch = 0 : i64, scratch_operands = 3 : i64, tpu.core_type = #tpu.core_type<tc>, window_params = [{}, {pipeline_mode = #tpu.pipeline_mode<synchronous>, transform_indices = @transform_1, window_bounds = array<i64: 8, 72>}, {pipeline_mode = #tpu.pipeline_mode<synchronous>, transform_indices = @transform_2, window_bounds = array<i64: 8, 1>}, {transform_indices = @transform_3, window_bounds = array<i64: 1, 256>}, {transform_indices = @transform_4, window_bounds = array<i64: 8, 256>}, {transform_indices = @transform_5, window_bounds = array<i64: 1, 8, 1>}, {transform_indices = @transform_6, window_bounds = array<i64: 1, 8, 1>}]} {
    %c3_i32 = arith.constant 3 : i32
    %0 = arith.muli %arg0, %c3_i32 : i32
    %1 = arith.addi %0, %arg1 : i32
    %c2_i32 = arith.constant 2 : i32
    %c0_i32 = arith.constant 0 : i32
    %2 = arith.cmpi eq, %c2_i32, %c0_i32 : i32
    %c1_i32 = arith.constant 1 : i32
    %3 = arith.select %2, %c1_i32, %c2_i32 : i32
    %4 = arith.remsi %arg1, %3 : i32
    %c0_i32_0 = arith.constant 0 : i32
    %5 = arith.cmpi ne, %4, %c0_i32_0 : i32
    %c0_i32_1 = arith.constant 0 : i32
    %6 = arith.cmpi slt, %4, %c0_i32_1 : i32
    %c0_i32_2 = arith.constant 0 : i32
    %7 = arith.cmpi slt, %3, %c0_i32_2 : i32
    %8 = arith.xori %6, %7 : i1
    %9 = arith.andi %8, %5 : i1
    %10 = arith.addi %4, %3 : i32
    %11 = arith.select %9, %10, %4 : i32
    %c0_i32_3 = arith.constant 0 : i32
    %12 = arith.cmpi eq, %arg1, %c0_i32_3 : i32
    %13 = arith.extui %12 : i1 to i32
    %c0_i32_4 = arith.constant 0 : i32
    %14 = arith.cmpi ne, %13, %c0_i32_4 : i32
    scf.if %14 {
      %c256_i32_49 = arith.constant 256 : i32
      %74 = arith.muli %1, %c256_i32_49 : i32
      %c0_i32_50 = arith.constant 0 : i32
      %75 = arith.addi %74, %c0_i32_50 : i32
      %76 = tpu.assume_multiple %75, 128 : i32
      %c0_i32_51 = arith.constant 0 : i32
      %77 = tpu.memref_slice %arg2[%c0_i32_51, %76] : memref<8x1024xf32, #tpu.memory_space<any>> -> memref<8x512xf32, #tpu.memory_space<any>>
      %c0_i32_52 = arith.constant 0 : i32
      %c0_i32_53 = arith.constant 0 : i32
      %78 = tpu.memref_slice %arg9[%11, %c0_i32_52, %c0_i32_53] : memref<2x8x512xf32, #tpu.memory_space<vmem>> -> memref<1x8x512xf32, #tpu.memory_space<vmem>>
      %79 = tpu.memref_squeeze %78 : memref<1x8x512xf32, #tpu.memory_space<vmem>> -> memref<8x512xf32, #tpu.memory_space<vmem>>
      %80 = tpu.memref_slice %arg11[%11] : memref<2x!tpu.dma_semaphore, #tpu.memory_space<semaphore_mem>> -> memref<1x!tpu.dma_semaphore, #tpu.memory_space<semaphore_mem>>
      %81 = tpu.memref_squeeze %80 : memref<1x!tpu.dma_semaphore, #tpu.memory_space<semaphore_mem>> -> memref<!tpu.dma_semaphore, #tpu.memory_space<semaphore_mem>>
      tpu.enqueue_dma source(%77 : memref<8x512xf32, #tpu.memory_space<any>>) target(%79 : memref<8x512xf32, #tpu.memory_space<vmem>>) target_semaphore(%81 : memref<!tpu.dma_semaphore, #tpu.memory_space<semaphore_mem>>)
    } else {
    }
    %c1_i32_5 = arith.constant 1 : i32
    %15 = arith.addi %arg1, %c1_i32_5 : i32
    %c3_i32_6 = arith.constant 3 : i32
    %16 = arith.cmpi slt, %15, %c3_i32_6 : i32
    %17 = arith.extui %16 : i1 to i32
    %c0_i32_7 = arith.constant 0 : i32
    %18 = arith.cmpi ne, %17, %c0_i32_7 : i32
    scf.if %18 {
      %c1_i32_49 = arith.constant 1 : i32
      %74 = arith.addi %1, %c1_i32_49 : i32
      %c1_i32_50 = arith.constant 1 : i32
      %75 = arith.subi %c1_i32_50, %11 : i32
      %c256_i32_51 = arith.constant 256 : i32
      %76 = arith.muli %74, %c256_i32_51 : i32
      %c0_i32_52 = arith.constant 0 : i32
      %77 = arith.addi %76, %c0_i32_52 : i32
      %78 = tpu.assume_multiple %77, 128 : i32
      %c0_i32_53 = arith.constant 0 : i32
      %79 = tpu.memref_slice %arg2[%c0_i32_53, %78] : memref<8x1024xf32, #tpu.memory_space<any>> -> memref<8x512xf32, #tpu.memory_space<any>>
      %c0_i32_54 = arith.constant 0 : i32
      %c0_i32_55 = arith.constant 0 : i32
      %80 = tpu.memref_slice %arg9[%75, %c0_i32_54, %c0_i32_55] : memref<2x8x512xf32, #tpu.memory_space<vmem>> -> memref<1x8x512xf32, #tpu.memory_space<vmem>>
      %81 = tpu.memref_squeeze %80 : memref<1x8x512xf32, #tpu.memory_space<vmem>> -> memref<8x512xf32, #tpu.memory_space<vmem>>
      %82 = tpu.memref_slice %arg11[%75] : memref<2x!tpu.dma_semaphore, #tpu.memory_space<semaphore_mem>> -> memref<1x!tpu.dma_semaphore, #tpu.memory_space<semaphore_mem>>
      %83 = tpu.memref_squeeze %82 : memref<1x!tpu.dma_semaphore, #tpu.memory_space<semaphore_mem>> -> memref<!tpu.dma_semaphore, #tpu.memory_space<semaphore_mem>>
      tpu.enqueue_dma source(%79 : memref<8x512xf32, #tpu.memory_space<any>>) target(%81 : memref<8x512xf32, #tpu.memory_space<vmem>>) target_semaphore(%83 : memref<!tpu.dma_semaphore, #tpu.memory_space<semaphore_mem>>)
    } else {
    }
    %c256_i32 = arith.constant 256 : i32
    %19 = arith.muli %1, %c256_i32 : i32
    %c0_i32_8 = arith.constant 0 : i32
    %20 = arith.addi %19, %c0_i32_8 : i32
    %21 = tpu.assume_multiple %20, 128 : i32
    %c0_i32_9 = arith.constant 0 : i32
    %22 = tpu.memref_slice %arg2[%c0_i32_9, %21] : memref<8x1024xf32, #tpu.memory_space<any>> -> memref<8x512xf32, #tpu.memory_space<any>>
    %c0_i32_10 = arith.constant 0 : i32
    %c0_i32_11 = arith.constant 0 : i32
    %23 = tpu.memref_slice %arg9[%11, %c0_i32_10, %c0_i32_11] : memref<2x8x512xf32, #tpu.memory_space<vmem>> -> memref<1x8x512xf32, #tpu.memory_space<vmem>>
    %24 = tpu.memref_squeeze %23 : memref<1x8x512xf32, #tpu.memory_space<vmem>> -> memref<8x512xf32, #tpu.memory_space<vmem>>
    %25 = tpu.memref_slice %arg11[%11] : memref<2x!tpu.dma_semaphore, #tpu.memory_space<semaphore_mem>> -> memref<1x!tpu.dma_semaphore, #tpu.memory_space<semaphore_mem>>
    %26 = tpu.memref_squeeze %25 : memref<1x!tpu.dma_semaphore, #tpu.memory_space<semaphore_mem>> -> memref<!tpu.dma_semaphore, #tpu.memory_space<semaphore_mem>>
    tpu.wait_dma2 semaphore(%26 : memref<!tpu.dma_semaphore, #tpu.memory_space<semaphore_mem>>) src(%22 : memref<8x512xf32, #tpu.memory_space<any>>) dst(%24 : memref<8x512xf32, #tpu.memory_space<vmem>>)
    %27 = arith.index_cast %11 : i32 to index
    %c0 = arith.constant 0 : index
    %c0_12 = arith.constant 0 : index
    %28 = vector.load %arg9[%27, %c0, %c0_12] : memref<2x8x512xf32, #tpu.memory_space<vmem>>, vector<1x8x512xf32>
    %29 = vector.shape_cast %28 : vector<1x8x512xf32> to vector<8x512xf32>
    %30 = vector.extract_strided_slice %29 {offsets = [0, 109], sizes = [8, 256], strides = [1, 1]} : vector<8x512xf32> to vector<8x256xf32>
    %c0_13 = arith.constant 0 : index
    %c0_14 = arith.constant 0 : index
    %31 = vector.load %arg10[%c0_13, %c0_14] : memref<72x256xf32, #tpu.memory_space<vmem>>, vector<8x256xf32>
    tpu.vector_store %arg10[%c0_13, %c0_14], %30 {strides = array<i32>} : memref<72x256xf32, #tpu.memory_space<vmem>>, vector<8x256xf32>,
    %32 = vector.extract_strided_slice %29 {offsets = [0, 110], sizes = [8, 256], strides = [1, 1]} : vector<8x512xf32> to vector<8x256xf32>
    %c8 = arith.constant 8 : index
    %c0_15 = arith.constant 0 : index
    %33 = vector.load %arg10[%c8, %c0_15] : memref<72x256xf32, #tpu.memory_space<vmem>>, vector<8x256xf32>
    tpu.vector_store %arg10[%c8, %c0_15], %32 {strides = array<i32>} : memref<72x256xf32, #tpu.memory_space<vmem>>, vector<8x256xf32>,
    %34 = vector.extract_strided_slice %29 {offsets = [0, 111], sizes = [8, 256], strides = [1, 1]} : vector<8x512xf32> to vector<8x256xf32>
    %c16 = arith.constant 16 : index
    %c0_16 = arith.constant 0 : index
    %35 = vector.load %arg10[%c16, %c0_16] : memref<72x256xf32, #tpu.memory_space<vmem>>, vector<8x256xf32>
    tpu.vector_store %arg10[%c16, %c0_16], %34 {strides = array<i32>} : memref<72x256xf32, #tpu.memory_space<vmem>>, vector<8x256xf32>,
    %36 = vector.extract_strided_slice %29 {offsets = [0, 127], sizes = [8, 256], strides = [1, 1]} : vector<8x512xf32> to vector<8x256xf32>
    %c24 = arith.constant 24 : index
    %c0_17 = arith.constant 0 : index
    %37 = vector.load %arg10[%c24, %c0_17] : memref<72x256xf32, #tpu.memory_space<vmem>>, vector<8x256xf32>
    tpu.vector_store %arg10[%c24, %c0_17], %36 {strides = array<i32>} : memref<72x256xf32, #tpu.memory_space<vmem>>, vector<8x256xf32>,
    %38 = vector.extract_strided_slice %29 {offsets = [0, 128], sizes = [8, 256], strides = [1, 1]} : vector<8x512xf32> to vector<8x256xf32>
    %c32 = arith.constant 32 : index
    %c0_18 = arith.constant 0 : index
    %39 = vector.load %arg10[%c32, %c0_18] : memref<72x256xf32, #tpu.memory_space<vmem>>, vector<8x256xf32>
    tpu.vector_store %arg10[%c32, %c0_18], %38 {strides = array<i32>} : memref<72x256xf32, #tpu.memory_space<vmem>>, vector<8x256xf32>,
    %40 = vector.extract_strided_slice %29 {offsets = [0, 129], sizes = [8, 256], strides = [1, 1]} : vector<8x512xf32> to vector<8x256xf32>
    %c40 = arith.constant 40 : index
    %c0_19 = arith.constant 0 : index
    %41 = vector.load %arg10[%c40, %c0_19] : memref<72x256xf32, #tpu.memory_space<vmem>>, vector<8x256xf32>
    tpu.vector_store %arg10[%c40, %c0_19], %40 {strides = array<i32>} : memref<72x256xf32, #tpu.memory_space<vmem>>, vector<8x256xf32>,
    %42 = vector.extract_strided_slice %29 {offsets = [0, 145], sizes = [8, 256], strides = [1, 1]} : vector<8x512xf32> to vector<8x256xf32>
    %c48 = arith.constant 48 : index
    %c0_20 = arith.constant 0 : index
    %43 = vector.load %arg10[%c48, %c0_20] : memref<72x256xf32, #tpu.memory_space<vmem>>, vector<8x256xf32>
    tpu.vector_store %arg10[%c48, %c0_20], %42 {strides = array<i32>} : memref<72x256xf32, #tpu.memory_space<vmem>>, vector<8x256xf32>,
    %44 = vector.extract_strided_slice %29 {offsets = [0, 146], sizes = [8, 256], strides = [1, 1]} : vector<8x512xf32> to vector<8x256xf32>
    %c56 = arith.constant 56 : index
    %c0_21 = arith.constant 0 : index
    %45 = vector.load %arg10[%c56, %c0_21] : memref<72x256xf32, #tpu.memory_space<vmem>>, vector<8x256xf32>
    tpu.vector_store %arg10[%c56, %c0_21], %44 {strides = array<i32>} : memref<72x256xf32, #tpu.memory_space<vmem>>, vector<8x256xf32>,
    %46 = vector.extract_strided_slice %29 {offsets = [0, 147], sizes = [8, 256], strides = [1, 1]} : vector<8x512xf32> to vector<8x256xf32>
    %c64 = arith.constant 64 : index
    %c0_22 = arith.constant 0 : index
    %47 = vector.load %arg10[%c64, %c0_22] : memref<72x256xf32, #tpu.memory_space<vmem>>, vector<8x256xf32>
    tpu.vector_store %arg10[%c64, %c0_22], %46 {strides = array<i32>} : memref<72x256xf32, #tpu.memory_space<vmem>>, vector<8x256xf32>,
    %c0_23 = arith.constant 0 : index
    %c0_24 = arith.constant 0 : index
    %48 = vector.load %arg3[%c0_23, %c0_24] : memref<8x72xf32, #tpu.memory_space<vmem>>, vector<8x72xf32>
    %c0_25 = arith.constant 0 : index
    %c0_26 = arith.constant 0 : index
    %49 = vector.load %arg10[%c0_25, %c0_26] : memref<72x256xf32, #tpu.memory_space<vmem>>, vector<72x256xf32>
    %cst = arith.constant dense<0.000000e+00> : vector<8x256xf32>
    %50 = tpu.matmul %48, %49, %cst {dimension_numbers = #tpu.dot_dimension_numbers<[1], [0], [0], [1], [0, 0, 1, 1], [], []>} : vector<8x72xf32>, vector<72x256xf32>, vector<8x256xf32> -> vector<8x256xf32>
    %c0_27 = arith.constant 0 : index
    %c0_28 = arith.constant 0 : index
    %51 = vector.load %arg4[%c0_27, %c0_28] : memref<8x1xf32, #tpu.memory_space<vmem>>, vector<8x1xf32>
    %52 = vector.broadcast %51 : vector<8x1xf32> to vector<8x256xf32>
    %53 = arith.addf %50, %52 : vector<8x256xf32>
    %c0_29 = arith.constant 0 : index
    %c0_30 = arith.constant 0 : index
    %54 = vector.load %arg6[%c0_29, %c0_30] : memref<8x256xf32, #tpu.memory_space<vmem>>, vector<8x256xf32>
    tpu.vector_store %arg6[%c0_29, %c0_30], %53 {strides = array<i32>} : memref<8x256xf32, #tpu.memory_space<vmem>>, vector<8x256xf32>,
    %c0_i32_31 = arith.constant 0 : i32
    %55 = arith.cmpi eq, %arg1, %c0_i32_31 : i32
    %56 = arith.extui %55 : i1 to i32
    %c0_i32_32 = arith.constant 0 : i32
    %57 = arith.cmpi ne, %56, %c0_i32_32 : i32
    scf.if %57 {
      %cst_49 = arith.constant 0.000000e+00 : f32
      %74 = vector.broadcast %cst_49 : f32 to vector<1x8x1xf32>
      %c0_50 = arith.constant 0 : index
      %c0_51 = arith.constant 0 : index
      %c0_52 = arith.constant 0 : index
      %75 = vector.load %arg7[%c0_50, %c0_51, %c0_52] : memref<1x8x1xf32, #tpu.memory_space<vmem>>, vector<1x8x1xf32>
      tpu.vector_store %arg7[%c0_50, %c0_51, %c0_52], %74 {strides = array<i32>} : memref<1x8x1xf32, #tpu.memory_space<vmem>>, vector<1x8x1xf32>,
      %cst_53 = arith.constant 0.000000e+00 : f32
      %76 = vector.broadcast %cst_53 : f32 to vector<1x8x1xf32>
      %c0_54 = arith.constant 0 : index
      %c0_55 = arith.constant 0 : index
      %c0_56 = arith.constant 0 : index
      %77 = vector.load %arg8[%c0_54, %c0_55, %c0_56] : memref<1x8x1xf32, #tpu.memory_space<vmem>>, vector<1x8x1xf32>
      tpu.vector_store %arg8[%c0_54, %c0_55, %c0_56], %76 {strides = array<i32>} : memref<1x8x1xf32, #tpu.memory_space<vmem>>, vector<1x8x1xf32>,
    } else {
    }
    %c0_33 = arith.constant 0 : index
    %c0_34 = arith.constant 0 : index
    %58 = vector.load %arg5[%c0_33, %c0_34] : memref<1x256xf32, #tpu.memory_space<vmem>>, vector<1x256xf32>
    %59 = vector.broadcast %58 : vector<1x256xf32> to vector<8x256xf32>
    %60 = arith.mulf %53, %59 : vector<8x256xf32>
    %c0_35 = arith.constant 0 : index
    %c0_36 = arith.constant 0 : index
    %c0_37 = arith.constant 0 : index
    %61 = vector.load %arg7[%c0_35, %c0_36, %c0_37] : memref<1x8x1xf32, #tpu.memory_space<vmem>>, vector<1x8x1xf32>
    %cst_38 = arith.constant dense<0.000000e+00> : vector<8xf32>
    %62 = vector.multi_reduction <add>, %60, %cst_38 [1] : vector<8x256xf32> to vector<8xf32>
    %63 = vector.shape_cast %62 : vector<8xf32> to vector<8x1xf32>
    %64 = vector.shape_cast %63 : vector<8x1xf32> to vector<1x8x1xf32>
    %65 = arith.addf %61, %64 : vector<1x8x1xf32>
    %c0_39 = arith.constant 0 : index
    %c0_40 = arith.constant 0 : index
    %c0_41 = arith.constant 0 : index
    %66 = vector.load %arg7[%c0_39, %c0_40, %c0_41] : memref<1x8x1xf32, #tpu.memory_space<vmem>>, vector<1x8x1xf32>
    tpu.vector_store %arg7[%c0_39, %c0_40, %c0_41], %65 {strides = array<i32>} : memref<1x8x1xf32, #tpu.memory_space<vmem>>, vector<1x8x1xf32>,
    %c0_42 = arith.constant 0 : index
    %c0_43 = arith.constant 0 : index
    %c0_44 = arith.constant 0 : index
    %67 = vector.load %arg8[%c0_42, %c0_43, %c0_44] : memref<1x8x1xf32, #tpu.memory_space<vmem>>, vector<1x8x1xf32>
    %68 = arith.mulf %60, %53 : vector<8x256xf32>
    %cst_45 = arith.constant dense<0.000000e+00> : vector<8xf32>
    %69 = vector.multi_reduction <add>, %68, %cst_45 [1] : vector<8x256xf32> to vector<8xf32>
    %70 = vector.shape_cast %69 : vector<8xf32> to vector<8x1xf32>
    %71 = vector.shape_cast %70 : vector<8x1xf32> to vector<1x8x1xf32>
    %72 = arith.addf %67, %71 : vector<1x8x1xf32>
    %c0_46 = arith.constant 0 : index
    %c0_47 = arith.constant 0 : index
    %c0_48 = arith.constant 0 : index
    %73 = vector.load %arg8[%c0_46, %c0_47, %c0_48] : memref<1x8x1xf32, #tpu.memory_space<vmem>>, vector<1x8x1xf32>
    tpu.vector_store %arg8[%c0_46, %c0_47, %c0_48], %72 {strides = array<i32>} : memref<1x8x1xf32, #tpu.memory_space<vmem>>, vector<1x8x1xf32>,
    return
  }
  func.func @transform_1(%arg0: i32, %arg1: i32) -> (i32, i32) {
    %c0_i32 = arith.constant 0 : i32
    %c0_i32_0 = arith.constant 0 : i32
    %c0_i32_1 = arith.constant 0 : i32
    return %c0_i32, %c0_i32_0 : i32, i32
  }
  func.func @transform_2(%arg0: i32, %arg1: i32) -> (i32, i32) {
    %c0_i32 = arith.constant 0 : i32
    %c0_i32_0 = arith.constant 0 : i32
    %c0_i32_1 = arith.constant 0 : i32
    return %c0_i32, %c0_i32_0 : i32, i32
  }
  func.func @transform_3(%arg0: i32, %arg1: i32) -> (i32, i32) {
    %c3_i32 = arith.constant 3 : i32
    %0 = arith.muli %arg0, %c3_i32 : i32
    %1 = arith.addi %0, %arg1 : i32
    %c1_i32 = arith.constant 1 : i32
    %2 = arith.addi %1, %c1_i32 : i32
    %c0_i32 = arith.constant 0 : i32
    %c0_i32_0 = arith.constant 0 : i32
    return %c0_i32, %2 : i32, i32
  }
  func.func @transform_4(%arg0: i32, %arg1: i32) -> (i32, i32) {
    %c3_i32 = arith.constant 3 : i32
    %0 = arith.muli %arg0, %c3_i32 : i32
    %1 = arith.addi %0, %arg1 : i32
    %c1_i32 = arith.constant 1 : i32
    %2 = arith.addi %1, %c1_i32 : i32
    %c0_i32 = arith.constant 0 : i32
    %c0_i32_0 = arith.constant 0 : i32
    return %c0_i32, %2 : i32, i32
  }
  func.func @transform_5(%arg0: i32, %arg1: i32) -> (i32, i32, i32) {
    %c0_i32 = arith.constant 0 : i32
    %c0_i32_0 = arith.constant 0 : i32
    %c0_i32_1 = arith.constant 0 : i32
    return %arg0, %c0_i32, %c0_i32_0 : i32, i32, i32
  }
  func.func @transform_6(%arg0: i32, %arg1: i32) -> (i32, i32, i32) {
    %c0_i32 = arith.constant 0 : i32
    %c0_i32_0 = arith.constant 0 : i32
    %c0_i32_1 = arith.constant 0 : i32
    return %arg0, %c0_i32, %c0_i32_0 : i32, i32, i32
  }
}

module attributes {stable_mosaic.version = 11 : i64} {
  func.func @conv2_kernel(%arg0: i32, %arg1: i32, %arg2: memref<8x1280xf32, #tpu.memory_space<any>>, %arg3: memref<1x1280xf32, #tpu.memory_space<any>>, %arg4: memref<16x72xf32, #tpu.memory_space<vmem>>, %arg5: memref<16x1xf32, #tpu.memory_space<vmem>>, %arg6: memref<8x1xf32, #tpu.memory_space<vmem>>, %arg7: memref<8x1xf32, #tpu.memory_space<vmem>>, %arg8: memref<8x256xf32, #tpu.memory_space<vmem>>, %arg9: memref<2x8x512xf32, #tpu.memory_space<vmem>>, %arg10: memref<2x1x512xf32, #tpu.memory_space<vmem>>, %arg11: memref<72x256xf32, #tpu.memory_space<vmem>>, %arg12: memref<2x!tpu.dma_semaphore, #tpu.memory_space<semaphore_mem>>, %arg13: memref<2x!tpu.dma_semaphore, #tpu.memory_space<semaphore_mem>>) attributes {dimension_semantics = [#tpu.dimension_semantics<parallel>, #tpu.dimension_semantics<arbitrary>], iteration_bounds = array<i64: 1, 3>, scalar_prefetch = 0 : i64, scratch_operands = 5 : i64, tpu.core_type = #tpu.core_type<tc>, window_params = [{}, {}, {pipeline_mode = #tpu.pipeline_mode<synchronous>, transform_indices = @transform_2, window_bounds = array<i64: 16, 72>}, {pipeline_mode = #tpu.pipeline_mode<synchronous>, transform_indices = @transform_3, window_bounds = array<i64: 16, 1>}, {pipeline_mode = #tpu.pipeline_mode<synchronous>, transform_indices = @transform_4, window_bounds = array<i64: 8, 1>}, {pipeline_mode = #tpu.pipeline_mode<synchronous>, transform_indices = @transform_5, window_bounds = array<i64: 8, 1>}, {transform_indices = @transform_6, window_bounds = array<i64: 8, 256>}]} {
    %c3_i32 = arith.constant 3 : i32
    %0 = arith.muli %arg0, %c3_i32 : i32
    %1 = arith.addi %0, %arg1 : i32
    %c2_i32 = arith.constant 2 : i32
    %c0_i32 = arith.constant 0 : i32
    %2 = arith.cmpi eq, %c2_i32, %c0_i32 : i32
    %c1_i32 = arith.constant 1 : i32
    %3 = arith.select %2, %c1_i32, %c2_i32 : i32
    %4 = arith.remsi %arg1, %3 : i32
    %c0_i32_0 = arith.constant 0 : i32
    %5 = arith.cmpi ne, %4, %c0_i32_0 : i32
    %c0_i32_1 = arith.constant 0 : i32
    %6 = arith.cmpi slt, %4, %c0_i32_1 : i32
    %c0_i32_2 = arith.constant 0 : i32
    %7 = arith.cmpi slt, %3, %c0_i32_2 : i32
    %8 = arith.xori %6, %7 : i1
    %9 = arith.andi %8, %5 : i1
    %10 = arith.addi %4, %3 : i32
    %11 = arith.select %9, %10, %4 : i32
    %c0_i32_3 = arith.constant 0 : i32
    %12 = arith.cmpi eq, %arg1, %c0_i32_3 : i32
    %13 = arith.extui %12 : i1 to i32
    %c0_i32_4 = arith.constant 0 : i32
    %14 = arith.cmpi ne, %13, %c0_i32_4 : i32
    scf.if %14 {
      %c256_i32_43 = arith.constant 256 : i32
      %84 = arith.muli %1, %c256_i32_43 : i32
      %c128_i32_44 = arith.constant 128 : i32
      %85 = arith.addi %84, %c128_i32_44 : i32
      %86 = tpu.assume_multiple %85, 128 : i32
      %c0_i32_45 = arith.constant 0 : i32
      %87 = tpu.memref_slice %arg2[%c0_i32_45, %86] : memref<8x1280xf32, #tpu.memory_space<any>> -> memref<8x512xf32, #tpu.memory_space<any>>
      %c0_i32_46 = arith.constant 0 : i32
      %c0_i32_47 = arith.constant 0 : i32
      %88 = tpu.memref_slice %arg9[%11, %c0_i32_46, %c0_i32_47] : memref<2x8x512xf32, #tpu.memory_space<vmem>> -> memref<1x8x512xf32, #tpu.memory_space<vmem>>
      %89 = tpu.memref_squeeze %88 : memref<1x8x512xf32, #tpu.memory_space<vmem>> -> memref<8x512xf32, #tpu.memory_space<vmem>>
      %90 = tpu.memref_slice %arg12[%11] : memref<2x!tpu.dma_semaphore, #tpu.memory_space<semaphore_mem>> -> memref<1x!tpu.dma_semaphore, #tpu.memory_space<semaphore_mem>>
      %91 = tpu.memref_squeeze %90 : memref<1x!tpu.dma_semaphore, #tpu.memory_space<semaphore_mem>> -> memref<!tpu.dma_semaphore, #tpu.memory_space<semaphore_mem>>
      tpu.enqueue_dma source(%87 : memref<8x512xf32, #tpu.memory_space<any>>) target(%89 : memref<8x512xf32, #tpu.memory_space<vmem>>) target_semaphore(%91 : memref<!tpu.dma_semaphore, #tpu.memory_space<semaphore_mem>>)
      %c0_i32_48 = arith.constant 0 : i32
      %92 = tpu.memref_slice %arg3[%c0_i32_48, %86] : memref<1x1280xf32, #tpu.memory_space<any>> -> memref<1x512xf32, #tpu.memory_space<any>>
      %c0_i32_49 = arith.constant 0 : i32
      %c0_i32_50 = arith.constant 0 : i32
      %93 = tpu.memref_slice %arg10[%11, %c0_i32_49, %c0_i32_50] : memref<2x1x512xf32, #tpu.memory_space<vmem>> -> memref<1x1x512xf32, #tpu.memory_space<vmem>>
      %94 = tpu.memref_squeeze %93 : memref<1x1x512xf32, #tpu.memory_space<vmem>> -> memref<1x512xf32, #tpu.memory_space<vmem>>
      %95 = tpu.memref_slice %arg13[%11] : memref<2x!tpu.dma_semaphore, #tpu.memory_space<semaphore_mem>> -> memref<1x!tpu.dma_semaphore, #tpu.memory_space<semaphore_mem>>
      %96 = tpu.memref_squeeze %95 : memref<1x!tpu.dma_semaphore, #tpu.memory_space<semaphore_mem>> -> memref<!tpu.dma_semaphore, #tpu.memory_space<semaphore_mem>>
      tpu.enqueue_dma source(%92 : memref<1x512xf32, #tpu.memory_space<any>>) target(%94 : memref<1x512xf32, #tpu.memory_space<vmem>>) target_semaphore(%96 : memref<!tpu.dma_semaphore, #tpu.memory_space<semaphore_mem>>)
    } else {
    }
    %c1_i32_5 = arith.constant 1 : i32
    %15 = arith.addi %arg1, %c1_i32_5 : i32
    %c3_i32_6 = arith.constant 3 : i32
    %16 = arith.cmpi slt, %15, %c3_i32_6 : i32
    %17 = arith.extui %16 : i1 to i32
    %c0_i32_7 = arith.constant 0 : i32
    %18 = arith.cmpi ne, %17, %c0_i32_7 : i32
    scf.if %18 {
      %c1_i32_43 = arith.constant 1 : i32
      %84 = arith.addi %1, %c1_i32_43 : i32
      %c1_i32_44 = arith.constant 1 : i32
      %85 = arith.subi %c1_i32_44, %11 : i32
      %c256_i32_45 = arith.constant 256 : i32
      %86 = arith.muli %84, %c256_i32_45 : i32
      %c128_i32_46 = arith.constant 128 : i32
      %87 = arith.addi %86, %c128_i32_46 : i32
      %88 = tpu.assume_multiple %87, 128 : i32
      %c0_i32_47 = arith.constant 0 : i32
      %89 = tpu.memref_slice %arg2[%c0_i32_47, %88] : memref<8x1280xf32, #tpu.memory_space<any>> -> memref<8x512xf32, #tpu.memory_space<any>>
      %c0_i32_48 = arith.constant 0 : i32
      %c0_i32_49 = arith.constant 0 : i32
      %90 = tpu.memref_slice %arg9[%85, %c0_i32_48, %c0_i32_49] : memref<2x8x512xf32, #tpu.memory_space<vmem>> -> memref<1x8x512xf32, #tpu.memory_space<vmem>>
      %91 = tpu.memref_squeeze %90 : memref<1x8x512xf32, #tpu.memory_space<vmem>> -> memref<8x512xf32, #tpu.memory_space<vmem>>
      %92 = tpu.memref_slice %arg12[%85] : memref<2x!tpu.dma_semaphore, #tpu.memory_space<semaphore_mem>> -> memref<1x!tpu.dma_semaphore, #tpu.memory_space<semaphore_mem>>
      %93 = tpu.memref_squeeze %92 : memref<1x!tpu.dma_semaphore, #tpu.memory_space<semaphore_mem>> -> memref<!tpu.dma_semaphore, #tpu.memory_space<semaphore_mem>>
      tpu.enqueue_dma source(%89 : memref<8x512xf32, #tpu.memory_space<any>>) target(%91 : memref<8x512xf32, #tpu.memory_space<vmem>>) target_semaphore(%93 : memref<!tpu.dma_semaphore, #tpu.memory_space<semaphore_mem>>)
      %c0_i32_50 = arith.constant 0 : i32
      %94 = tpu.memref_slice %arg3[%c0_i32_50, %88] : memref<1x1280xf32, #tpu.memory_space<any>> -> memref<1x512xf32, #tpu.memory_space<any>>
      %c0_i32_51 = arith.constant 0 : i32
      %c0_i32_52 = arith.constant 0 : i32
      %95 = tpu.memref_slice %arg10[%85, %c0_i32_51, %c0_i32_52] : memref<2x1x512xf32, #tpu.memory_space<vmem>> -> memref<1x1x512xf32, #tpu.memory_space<vmem>>
      %96 = tpu.memref_squeeze %95 : memref<1x1x512xf32, #tpu.memory_space<vmem>> -> memref<1x512xf32, #tpu.memory_space<vmem>>
      %97 = tpu.memref_slice %arg13[%85] : memref<2x!tpu.dma_semaphore, #tpu.memory_space<semaphore_mem>> -> memref<1x!tpu.dma_semaphore, #tpu.memory_space<semaphore_mem>>
      %98 = tpu.memref_squeeze %97 : memref<1x!tpu.dma_semaphore, #tpu.memory_space<semaphore_mem>> -> memref<!tpu.dma_semaphore, #tpu.memory_space<semaphore_mem>>
      tpu.enqueue_dma source(%94 : memref<1x512xf32, #tpu.memory_space<any>>) target(%96 : memref<1x512xf32, #tpu.memory_space<vmem>>) target_semaphore(%98 : memref<!tpu.dma_semaphore, #tpu.memory_space<semaphore_mem>>)
    } else {
    }
    %c256_i32 = arith.constant 256 : i32
    %19 = arith.muli %1, %c256_i32 : i32
    %c128_i32 = arith.constant 128 : i32
    %20 = arith.addi %19, %c128_i32 : i32
    %21 = tpu.assume_multiple %20, 128 : i32
    %c0_i32_8 = arith.constant 0 : i32
    %22 = tpu.memref_slice %arg2[%c0_i32_8, %21] : memref<8x1280xf32, #tpu.memory_space<any>> -> memref<8x512xf32, #tpu.memory_space<any>>
    %c0_i32_9 = arith.constant 0 : i32
    %c0_i32_10 = arith.constant 0 : i32
    %23 = tpu.memref_slice %arg9[%11, %c0_i32_9, %c0_i32_10] : memref<2x8x512xf32, #tpu.memory_space<vmem>> -> memref<1x8x512xf32, #tpu.memory_space<vmem>>
    %24 = tpu.memref_squeeze %23 : memref<1x8x512xf32, #tpu.memory_space<vmem>> -> memref<8x512xf32, #tpu.memory_space<vmem>>
    %25 = tpu.memref_slice %arg12[%11] : memref<2x!tpu.dma_semaphore, #tpu.memory_space<semaphore_mem>> -> memref<1x!tpu.dma_semaphore, #tpu.memory_space<semaphore_mem>>
    %26 = tpu.memref_squeeze %25 : memref<1x!tpu.dma_semaphore, #tpu.memory_space<semaphore_mem>> -> memref<!tpu.dma_semaphore, #tpu.memory_space<semaphore_mem>>
    tpu.wait_dma2 semaphore(%26 : memref<!tpu.dma_semaphore, #tpu.memory_space<semaphore_mem>>) src(%22 : memref<8x512xf32, #tpu.memory_space<any>>) dst(%24 : memref<8x512xf32, #tpu.memory_space<vmem>>)
    %c0_i32_11 = arith.constant 0 : i32
    %27 = tpu.memref_slice %arg3[%c0_i32_11, %21] : memref<1x1280xf32, #tpu.memory_space<any>> -> memref<1x512xf32, #tpu.memory_space<any>>
    %c0_i32_12 = arith.constant 0 : i32
    %c0_i32_13 = arith.constant 0 : i32
    %28 = tpu.memref_slice %arg10[%11, %c0_i32_12, %c0_i32_13] : memref<2x1x512xf32, #tpu.memory_space<vmem>> -> memref<1x1x512xf32, #tpu.memory_space<vmem>>
    %29 = tpu.memref_squeeze %28 : memref<1x1x512xf32, #tpu.memory_space<vmem>> -> memref<1x512xf32, #tpu.memory_space<vmem>>
    %30 = tpu.memref_slice %arg13[%11] : memref<2x!tpu.dma_semaphore, #tpu.memory_space<semaphore_mem>> -> memref<1x!tpu.dma_semaphore, #tpu.memory_space<semaphore_mem>>
    %31 = tpu.memref_squeeze %30 : memref<1x!tpu.dma_semaphore, #tpu.memory_space<semaphore_mem>> -> memref<!tpu.dma_semaphore, #tpu.memory_space<semaphore_mem>>
    tpu.wait_dma2 semaphore(%31 : memref<!tpu.dma_semaphore, #tpu.memory_space<semaphore_mem>>) src(%27 : memref<1x512xf32, #tpu.memory_space<any>>) dst(%29 : memref<1x512xf32, #tpu.memory_space<vmem>>)
    %32 = arith.index_cast %11 : i32 to index
    %c0 = arith.constant 0 : index
    %c0_14 = arith.constant 0 : index
    %33 = vector.load %arg9[%32, %c0, %c0_14] : memref<2x8x512xf32, #tpu.memory_space<vmem>>, vector<1x8x512xf32>
    %34 = vector.shape_cast %33 : vector<1x8x512xf32> to vector<8x512xf32>
    %35 = arith.index_cast %11 : i32 to index
    %c0_15 = arith.constant 0 : index
    %c0_16 = arith.constant 0 : index
    %36 = vector.load %arg10[%35, %c0_15, %c0_16] : memref<2x1x512xf32, #tpu.memory_space<vmem>>, vector<1x1x512xf32>
    %37 = vector.shape_cast %36 : vector<1x1x512xf32> to vector<1x512xf32>
    %cst = arith.constant 5.000000e-01 : f32
    %38 = vector.broadcast %cst : f32 to vector<1x512xf32>
    %39 = arith.cmpf ogt, %37, %38 : vector<1x512xf32>
    %c0_17 = arith.constant 0 : index
    %c0_18 = arith.constant 0 : index
    %40 = vector.load %arg6[%c0_17, %c0_18] : memref<8x1xf32, #tpu.memory_space<vmem>>, vector<8x1xf32>
    %41 = vector.broadcast %40 : vector<8x1xf32> to vector<8x512xf32>
    %42 = arith.mulf %34, %41 : vector<8x512xf32>
    %c0_19 = arith.constant 0 : index
    %c0_20 = arith.constant 0 : index
    %43 = vector.load %arg7[%c0_19, %c0_20] : memref<8x1xf32, #tpu.memory_space<vmem>>, vector<8x1xf32>
    %44 = vector.broadcast %43 : vector<8x1xf32> to vector<8x512xf32>
    %45 = arith.addf %42, %44 : vector<8x512xf32>
    %cst_21 = arith.constant 0.000000e+00 : f32
    %46 = vector.broadcast %cst_21 : f32 to vector<8x512xf32>
    %47 = arith.maximumf %45, %46 : vector<8x512xf32>
    %cst_22 = arith.constant 0.000000e+00 : f32
    %48 = vector.shape_cast %39 : vector<1x512xi1> to vector<1x512xi1>
    %49 = vector.broadcast %48 : vector<1x512xi1> to vector<8x512xi1>
    %50 = vector.broadcast %cst_22 : f32 to vector<8x512xf32>
    %51 = arith.select %49, %47, %50 : vector<8x512xi1>, vector<8x512xf32>
    %52 = vector.extract_strided_slice %51 {offsets = [0, 128], sizes = [8, 256], strides = [1, 1]} : vector<8x512xf32> to vector<8x256xf32>
    %53 = vector.extract_strided_slice %51 {offsets = [0, 109], sizes = [8, 256], strides = [1, 1]} : vector<8x512xf32> to vector<8x256xf32>
    %c0_23 = arith.constant 0 : index
    %c0_24 = arith.constant 0 : index
    %54 = vector.load %arg11[%c0_23, %c0_24] : memref<72x256xf32, #tpu.memory_space<vmem>>, vector<8x256xf32>
    tpu.vector_store %arg11[%c0_23, %c0_24], %53 {strides = array<i32>} : memref<72x256xf32, #tpu.memory_space<vmem>>, vector<8x256xf32>,
    %55 = vector.extract_strided_slice %51 {offsets = [0, 110], sizes = [8, 256], strides = [1, 1]} : vector<8x512xf32> to vector<8x256xf32>
    %c8 = arith.constant 8 : index
    %c0_25 = arith.constant 0 : index
    %56 = vector.load %arg11[%c8, %c0_25] : memref<72x256xf32, #tpu.memory_space<vmem>>, vector<8x256xf32>
    tpu.vector_store %arg11[%c8, %c0_25], %55 {strides = array<i32>} : memref<72x256xf32, #tpu.memory_space<vmem>>, vector<8x256xf32>,
    %57 = vector.extract_strided_slice %51 {offsets = [0, 111], sizes = [8, 256], strides = [1, 1]} : vector<8x512xf32> to vector<8x256xf32>
    %c16 = arith.constant 16 : index
    %c0_26 = arith.constant 0 : index
    %58 = vector.load %arg11[%c16, %c0_26] : memref<72x256xf32, #tpu.memory_space<vmem>>, vector<8x256xf32>
    tpu.vector_store %arg11[%c16, %c0_26], %57 {strides = array<i32>} : memref<72x256xf32, #tpu.memory_space<vmem>>, vector<8x256xf32>,
    %59 = vector.extract_strided_slice %51 {offsets = [0, 127], sizes = [8, 256], strides = [1, 1]} : vector<8x512xf32> to vector<8x256xf32>
    %c24 = arith.constant 24 : index
    %c0_27 = arith.constant 0 : index
    %60 = vector.load %arg11[%c24, %c0_27] : memref<72x256xf32, #tpu.memory_space<vmem>>, vector<8x256xf32>
    tpu.vector_store %arg11[%c24, %c0_27], %59 {strides = array<i32>} : memref<72x256xf32, #tpu.memory_space<vmem>>, vector<8x256xf32>,
    %61 = vector.extract_strided_slice %51 {offsets = [0, 128], sizes = [8, 256], strides = [1, 1]} : vector<8x512xf32> to vector<8x256xf32>
    %c32 = arith.constant 32 : index
    %c0_28 = arith.constant 0 : index
    %62 = vector.load %arg11[%c32, %c0_28] : memref<72x256xf32, #tpu.memory_space<vmem>>, vector<8x256xf32>
    tpu.vector_store %arg11[%c32, %c0_28], %61 {strides = array<i32>} : memref<72x256xf32, #tpu.memory_space<vmem>>, vector<8x256xf32>,
    %63 = vector.extract_strided_slice %51 {offsets = [0, 129], sizes = [8, 256], strides = [1, 1]} : vector<8x512xf32> to vector<8x256xf32>
    %c40 = arith.constant 40 : index
    %c0_29 = arith.constant 0 : index
    %64 = vector.load %arg11[%c40, %c0_29] : memref<72x256xf32, #tpu.memory_space<vmem>>, vector<8x256xf32>
    tpu.vector_store %arg11[%c40, %c0_29], %63 {strides = array<i32>} : memref<72x256xf32, #tpu.memory_space<vmem>>, vector<8x256xf32>,
    %65 = vector.extract_strided_slice %51 {offsets = [0, 145], sizes = [8, 256], strides = [1, 1]} : vector<8x512xf32> to vector<8x256xf32>
    %c48 = arith.constant 48 : index
    %c0_30 = arith.constant 0 : index
    %66 = vector.load %arg11[%c48, %c0_30] : memref<72x256xf32, #tpu.memory_space<vmem>>, vector<8x256xf32>
    tpu.vector_store %arg11[%c48, %c0_30], %65 {strides = array<i32>} : memref<72x256xf32, #tpu.memory_space<vmem>>, vector<8x256xf32>,
    %67 = vector.extract_strided_slice %51 {offsets = [0, 146], sizes = [8, 256], strides = [1, 1]} : vector<8x512xf32> to vector<8x256xf32>
    %c56 = arith.constant 56 : index
    %c0_31 = arith.constant 0 : index
    %68 = vector.load %arg11[%c56, %c0_31] : memref<72x256xf32, #tpu.memory_space<vmem>>, vector<8x256xf32>
    tpu.vector_store %arg11[%c56, %c0_31], %67 {strides = array<i32>} : memref<72x256xf32, #tpu.memory_space<vmem>>, vector<8x256xf32>,
    %69 = vector.extract_strided_slice %51 {offsets = [0, 147], sizes = [8, 256], strides = [1, 1]} : vector<8x512xf32> to vector<8x256xf32>
    %c64 = arith.constant 64 : index
    %c0_32 = arith.constant 0 : index
    %70 = vector.load %arg11[%c64, %c0_32] : memref<72x256xf32, #tpu.memory_space<vmem>>, vector<8x256xf32>
    tpu.vector_store %arg11[%c64, %c0_32], %69 {strides = array<i32>} : memref<72x256xf32, #tpu.memory_space<vmem>>, vector<8x256xf32>,
    %c0_33 = arith.constant 0 : index
    %c0_34 = arith.constant 0 : index
    %71 = vector.load %arg4[%c0_33, %c0_34] : memref<16x72xf32, #tpu.memory_space<vmem>>, vector<16x72xf32>
    %c0_35 = arith.constant 0 : index
    %c0_36 = arith.constant 0 : index
    %72 = vector.load %arg11[%c0_35, %c0_36] : memref<72x256xf32, #tpu.memory_space<vmem>>, vector<72x256xf32>
    %cst_37 = arith.constant dense<0.000000e+00> : vector<16x256xf32>
    %73 = tpu.matmul %71, %72, %cst_37 {dimension_numbers = #tpu.dot_dimension_numbers<[1], [0], [0], [1], [0, 0, 1, 1], [], []>} : vector<16x72xf32>, vector<72x256xf32>, vector<16x256xf32> -> vector<16x256xf32>
    %c0_38 = arith.constant 0 : index
    %c0_39 = arith.constant 0 : index
    %74 = vector.load %arg5[%c0_38, %c0_39] : memref<16x1xf32, #tpu.memory_space<vmem>>, vector<16x1xf32>
    %75 = vector.broadcast %74 : vector<16x1xf32> to vector<16x256xf32>
    %76 = arith.addf %73, %75 : vector<16x256xf32>
    %77 = vector.extract_strided_slice %76 {offsets = [0, 0], sizes = [8, 256], strides = [1, 1]} : vector<16x256xf32> to vector<8x256xf32>
    %78 = arith.mulf %77, %52 : vector<8x256xf32>
    %79 = vector.extract_strided_slice %76 {offsets = [8, 0], sizes = [8, 256], strides = [1, 1]} : vector<16x256xf32> to vector<8x256xf32>
    %80 = arith.addf %78, %79 : vector<8x256xf32>
    %cst_40 = arith.constant 0.000000e+00 : f32
    %81 = vector.broadcast %cst_40 : f32 to vector<8x256xf32>
    %82 = arith.maximumf %80, %81 : vector<8x256xf32>
    %c0_41 = arith.constant 0 : index
    %c0_42 = arith.constant 0 : index
    %83 = vector.load %arg8[%c0_41, %c0_42] : memref<8x256xf32, #tpu.memory_space<vmem>>, vector<8x256xf32>
    tpu.vector_store %arg8[%c0_41, %c0_42], %82 {strides = array<i32>} : memref<8x256xf32, #tpu.memory_space<vmem>>, vector<8x256xf32>,
    return
  }
  func.func @transform_2(%arg0: i32, %arg1: i32) -> (i32, i32) {
    %c0_i32 = arith.constant 0 : i32
    %c0_i32_0 = arith.constant 0 : i32
    %c0_i32_1 = arith.constant 0 : i32
    return %c0_i32, %c0_i32_0 : i32, i32
  }
  func.func @transform_3(%arg0: i32, %arg1: i32) -> (i32, i32) {
    %c0_i32 = arith.constant 0 : i32
    %c0_i32_0 = arith.constant 0 : i32
    %c0_i32_1 = arith.constant 0 : i32
    return %c0_i32, %c0_i32_0 : i32, i32
  }
  func.func @transform_4(%arg0: i32, %arg1: i32) -> (i32, i32) {
    %c0_i32 = arith.constant 0 : i32
    %c0_i32_0 = arith.constant 0 : i32
    %c0_i32_1 = arith.constant 0 : i32
    return %c0_i32, %c0_i32_0 : i32, i32
  }
  func.func @transform_5(%arg0: i32, %arg1: i32) -> (i32, i32) {
    %c0_i32 = arith.constant 0 : i32
    %c0_i32_0 = arith.constant 0 : i32
    %c0_i32_1 = arith.constant 0 : i32
    return %c0_i32, %c0_i32_0 : i32, i32
  }
  func.func @transform_6(%arg0: i32, %arg1: i32) -> (i32, i32) {
    %c3_i32 = arith.constant 3 : i32
    %0 = arith.muli %arg0, %c3_i32 : i32
    %1 = arith.addi %0, %arg1 : i32
    %c0_i32 = arith.constant 0 : i32
    %c0_i32_0 = arith.constant 0 : i32
    return %c0_i32, %1 : i32, i32
  }
}

</mosaic_0001>

<llo_original>
// kernel: srm_forward.2
$region0: #{srm_forward.2}
  #allocation0 [shape = 'u32[]', space=smem, size = 0x4, offset = 0x4, fixed_abs, tag = 'smem constant byte address 0x4 - core index']
  #allocation1 [shape = 'u32[144,128]{1,0:T(1,128)}', space=vmem, size = 0x12000, scoped, tag = 'internal scratch']
  #allocation2 [shape = 'f32[2,8,512]{2,1,0:T(8,128)}', space=vmem, size = 0x8000, scoped, tag = 'scratch operand']
  #allocation3 [shape = 'f32[72,256]{1,0:T(8,128)}', space=vmem, size = 0x12000, scoped, tag = 'scratch operand']
  #allocation4 [shape = 's32[2]{0}', space=sflag, size = 0x8, scoped, tag = 'scratch operand']
  #allocation5 [shape = 's32[]', space=sflag, size = 0x4, offset = 0, fixed_abs, tag = 'sflag constant byte address 0x0 - dummy sync flag']
  #allocation6 [shape = 's32[]', space=sflag, size = 0x4, offset = 0, fixed_abs, tag = 'sflag constant byte address 0x0 - dummy sync flag']
  %s0 = inlined_call_operand.vmem [shape: f32[8,1024], index: 0, kind: input, shape index: {}]
  %s1 = inlined_call_operand.vmem [shape: f32[8,72], index: 1, kind: input, shape index: {}]
  %s2 = inlined_call_operand.vmem [shape: f32[8,1], index: 2, kind: input, shape index: {}]
  %s3 = inlined_call_operand.vmem [shape: f32[1,1280], index: 3, kind: input, shape index: {}]
  %s4 = inlined_call_operand.vmem [shape: f32[8,1280], index: 4, kind: output, shape index: {0}]
  %s5 = inlined_call_operand.vmem [shape: f32[1,8,1], index: 5, kind: output, shape index: {1}]
  %s6 = inlined_call_operand.vmem [shape: f32[1,8,1], index: 6, kind: output, shape index: {2}]
  %7 = xla_tuple %s4, %s5, %s6
  %s8 = sld [smem:[#allocation0]]
  $region141: #{srm_forward.2} parent=0
    _
  %s10 = ssub.s32 1, %s8
  %s11 = scalar_select 0, %s10, %s8
  loop: start=0, step=1, limit=5
  $region2: #{srm_forward.2} parent=0 // loop_pre_header
    _
  $region3: #{srm_forward.2} parent=0 // loop_header
    %s13 = sphi 0, %s17
    %p14 = scmp.ge.s32.totalorder %s13, 5
    %s20 = sphi 0, %s32
    %s21 = sphi 0, %s28
    %s22 = sphi 0, %s20
    %s23 = sphi 0, %s21
    %s24 = sphi 0, %s22
    %s25 = sphi 0, %s23
    %s33 = sphi 0, %s33
    %s35 = sphi 0, %s33
    %s36 = sphi 0, %s35
    %s50 = sphi 0, %s36
    %s54 = sphi 0, %s54
    %s56 = sphi 0, %s54
    %s57 = sphi 0, %s56
    %s71 = sphi 0, %s57
    %s83 = sphi 0, %s85
    %s86 = sphi 0, %s83
    %s87 = sphi 0, %s86
    %s103 = sphi 0, %s87
    %s115 = sphi 0, %s117
    %s118 = sphi 0, %s115
    %s119 = sphi 0, %s118
    %s135 = sphi 0, %s119
    %s141 = sphi 0, %s143
    %s144 = sphi 0, %s141
    %s145 = sphi 0, %s144
    %s161 = sphi 0, %s145
    %s167 = sphi 0, %s169
    %s170 = sphi 0, %s167
    %s171 = sphi 0, %s170
    %s187 = sphi 0, %s171
  $region4: #{srm_forward.2} parent=0 // loop_header_branch
    %16 = sbr.rel (%p14) target = $region8
  $region5: #{srm_forward.2} parent=0 // loop_body
    %s18 = ssub.s32 %s13, 1
    %s19 = ssub.s32 %s13, 2
    %s26 = sadd.s32 1, %s21
    %p27 = scmp.ge.s32.totalorder %s26, 3
    %s28 = scalar_select %p27, 0, %s26
    %s29 = sadd.s32 1, %s20
    %s30 = scalar_select %p27, %s29, %s20
    %p31 = scmp.ge.s32.totalorder %s30, 1
    %s32 = scalar_select %p31, 0, %s30
    %s34 = sadd.s32 %s33, 1
    %p37 = scmp.eq.s32.totalorder %s13, 2
    %p38 = scmp.ne.s32.totalorder %s33, %s35
    %p39 = scmp.eq.s32.totalorder %s13, 0
    %p40 = por %p38, %p39
    %p41 = scmp.ne.s32.totalorder %s33, %s35
    %p42 = scmp.eq.s32.totalorder %s18, 2
    %p43 = por %p41, %p42
    %p44 = scmp.ne.s32.totalorder %s35, %s36
    %p45 = scmp.eq.s32.totalorder %s18, 0
    %p46 = por %p44, %p45
    %p47 = scmp.ne.s32.totalorder %s35, %s36
    %p48 = scmp.eq.s32.totalorder %s19, 2
    %p49 = por %p47, %p48
    %p51 = scmp.ne.s32.totalorder %s36, %s50
    %p52 = scmp.eq.s32.totalorder %s19, 0
    %p53 = por %p51, %p52
    %s55 = sadd.s32 %s54, 1
    %p58 = scmp.eq.s32.totalorder %s13, 2
    %p59 = scmp.ne.s32.totalorder %s54, %s56
    %p60 = scmp.eq.s32.totalorder %s13, 0
    %p61 = por %p59, %p60
    %p62 = scmp.ne.s32.totalorder %s54, %s56
    %p63 = scmp.eq.s32.totalorder %s18, 2
    %p64 = por %p62, %p63
    %p65 = scmp.ne.s32.totalorder %s56, %s57
    %p66 = scmp.eq.s32.totalorder %s18, 0
    %p67 = por %p65, %p66
    %p68 = scmp.ne.s32.totalorder %s56, %s57
    %p69 = scmp.eq.s32.totalorder %s19, 2
    %p70 = por %p68, %p69
    %p72 = scmp.ne.s32.totalorder %s57, %s71
    %p73 = scmp.eq.s32.totalorder %s19, 0
    %p74 = por %p72, %p73
    %s75 = smul.u32 %s20, 3
    %s76 = sadd.s32 %s75, %s21
    %s77 = sadd.s32 %s76, 1
    %s78 = smul.u32 %s32, 3
    %s79 = sadd.s32 %s78, %s28
    %s80 = sadd.s32 %s79, 1
    %s81 = ssub.s32 %s77, %s80
    %p82 = scmp.eq.s32.totalorder %s81, 0
    %s84 = sadd.s32 %s83, 1
    %s85 = scalar_select %p82, %s83, %s84
    %p88 = pneg %p82
    %p89 = scmp.eq.s32.totalorder %s13, 2
    %p90 = por %p88, %p89
    %p91 = scmp.ne.s32.totalorder %s83, %s86
    %p92 = scmp.eq.s32.totalorder %s13, 0
    %p93 = por %p91, %p92
    %p94 = scmp.ne.s32.totalorder %s83, %s86
    %p95 = scmp.eq.s32.totalorder %s18, 2
    %p96 = por %p94, %p95
    %p97 = scmp.ne.s32.totalorder %s86, %s87
    %p98 = scmp.eq.s32.totalorder %s18, 0
    %p99 = por %p97, %p98
    %p100 = scmp.ne.s32.totalorder %s86, %s87
    %p101 = scmp.eq.s32.totalorder %s19, 2
    %p102 = por %p100, %p101
    %p104 = scmp.ne.s32.totalorder %s87, %s103
    %p105 = scmp.eq.s32.totalorder %s19, 0
    %p106 = por %p104, %p105
    %s107 = smul.u32 %s20, 3
    %s108 = sadd.s32 %s107, %s21
    %s109 = sadd.s32 %s108, 1
    %s110 = smul.u32 %s32, 3
    %s111 = sadd.s32 %s110, %s28
    %s112 = sadd.s32 %s111, 1
    %s113 = ssub.s32 %s109, %s112
    %p114 = scmp.eq.s32.totalorder %s113, 0
    %s116 = sadd.s32 %s115, 1
    %s117 = scalar_select %p114, %s115, %s116
    %p120 = pneg %p114
    %p121 = scmp.eq.s32.totalorder %s13, 2
    %p122 = por %p120, %p121
    %p123 = scmp.ne.s32.totalorder %s115, %s118
    %p124 = scmp.eq.s32.totalorder %s13, 0
    %p125 = por %p123, %p124
    %p126 = scmp.ne.s32.totalorder %s115, %s118
    %p127 = scmp.eq.s32.totalorder %s18, 2
    %p128 = por %p126, %p127
    %p129 = scmp.ne.s32.totalorder %s118, %s119
    %p130 = scmp.eq.s32.totalorder %s18, 0
    %p131 = por %p129, %p130
    %p132 = scmp.ne.s32.totalorder %s118, %s119
    %p133 = scmp.eq.s32.totalorder %s19, 2
    %p134 = por %p132, %p133
    %p136 = scmp.ne.s32.totalorder %s119, %s135
    %p137 = scmp.eq.s32.totalorder %s19, 0
    %p138 = por %p136, %p137
    %s139 = ssub.s32 %s20, %s32
    %p140 = scmp.eq.s32.totalorder %s139, 0
    %s142 = sadd.s32 %s141, 1
    %s143 = scalar_select %p140, %s141, %s142
    %p146 = pneg %p140
    %p147 = scmp.eq.s32.totalorder %s13, 2
    %p148 = por %p146, %p147
    %p149 = scmp.ne.s32.totalorder %s141, %s144
    %p150 = scmp.eq.s32.totalorder %s13, 0
    %p151 = por %p149, %p150
    %p152 = scmp.ne.s32.totalorder %s141, %s144
    %p153 = scmp.eq.s32.totalorder %s18, 2
    %p154 = por %p152, %p153
    %p155 = scmp.ne.s32.totalorder %s144, %s145
    %p156 = scmp.eq.s32.totalorder %s18, 0
    %p157 = por %p155, %p156
    %p158 = scmp.ne.s32.totalorder %s144, %s145
    %p159 = scmp.eq.s32.totalorder %s19, 2
    %p160 = por %p158, %p159
    %p162 = scmp.ne.s32.totalorder %s145, %s161
    %p163 = scmp.eq.s32.totalorder %s19, 0
    %p164 = por %p162, %p163
    %s165 = ssub.s32 %s20, %s32
    %p166 = scmp.eq.s32.totalorder %s165, 0
    %s168 = sadd.s32 %s167, 1
    %s169 = scalar_select %p166, %s167, %s168
    %p172 = pneg %p166
    %p173 = scmp.eq.s32.totalorder %s13, 2
    %p174 = por %p172, %p173
    %p175 = scmp.ne.s32.totalorder %s167, %s170
    %p176 = scmp.eq.s32.totalorder %s13, 0
    %p177 = por %p175, %p176
    %p178 = scmp.ne.s32.totalorder %s167, %s170
    %p179 = scmp.eq.s32.totalorder %s18, 2
    %p180 = por %p178, %p179
    %p181 = scmp.ne.s32.totalorder %s170, %s171
    %p182 = scmp.eq.s32.totalorder %s18, 0
    %p183 = por %p181, %p182
    %p184 = scmp.ne.s32.totalorder %s170, %s171
    %p185 = scmp.eq.s32.totalorder %s19, 2
    %p186 = por %p184, %p185
    %p188 = scmp.ne.s32.totalorder %s171, %s187
    %p189 = scmp.eq.s32.totalorder %s19, 0
    %p190 = por %p188, %p189
    %p191 = scmp.le.s32.totalorder 1, %s13
    %p192 = scmp.lt.s32.totalorder %s13, 4
    %p193 = pnand %p191, %p192
    %p194 = pneg %p193
    // Predicated region
    $region9: #{srm_forward.2} parent=5 // pred_check
      _
    $region10: #{srm_forward.2} parent=5 // pred_check_branch
      %196 = sbr.rel (%p193) target = $region12
    $region11: #{srm_forward.2} parent=5 // pred_region
      %s197 = ssub.s32 %s13, 1
      // Predicated region
      $region13: #{srm_forward.2} parent=11 // pred_check
        %p198 = pneg %p46
      $region14: #{srm_forward.2} parent=11 // pred_check_branch
        %200 = sbr.rel (%p198) target = $region16
      $region15: #{srm_forward.2} parent=11 // pred_region
        _
      $region16: #{srm_forward.2} parent=11 // pred_fallthru
        _
      // Predicated region
      $region17: #{srm_forward.2} parent=11 // pred_check
        %p201 = pneg %p67
      $region18: #{srm_forward.2} parent=11 // pred_check_branch
        %203 = sbr.rel (%p201) target = $region20
      $region19: #{srm_forward.2} parent=11 // pred_region
        _
      $region20: #{srm_forward.2} parent=11 // pred_fallthru
        _
    $region12: #{srm_forward.2} parent=5 // pred_fallthru
      _
    %p204 = scmp.lt.s32.totalorder %s13, 3
    // Predicated region
    $region21: #{srm_forward.2} parent=5 // pred_check
      %p205 = pneg %p204
    $region22: #{srm_forward.2} parent=5 // pred_check_branch
      %207 = sbr.rel (%p205) target = $region24
    $region23: #{srm_forward.2} parent=5 // pred_region
      // Predicated region
      $region25: #{srm_forward.2} parent=23 // pred_check
        %p208 = pneg %p93
      $region26: #{srm_forward.2} parent=23 // pred_check_branch
        %210 = sbr.rel (%p208) target = $region28
      $region27: #{srm_forward.2} parent=23 // pred_region
        %s211 = smul.u32 %s20, 3
        %s212 = sadd.s32 %s211, %s21
        %s213 = sadd.s32 %s212, 1
        %s214 = smul.u32 2, %s213
        %p215 = scmp.lt.s32.totalorder %s214, 9
        %s216 = scalar_select %p215, %s214, 9
        %s217 = scalar_lea.vmem %s3, %s216
        %s218 = smul.u32 %s20, 3
        %s219 = sadd.s32 %s218, %s21
        %s220 = sadd.s32 %s219, 1
        %s221 = smul.u32 2, %s220
      $region28: #{srm_forward.2} parent=23 // pred_fallthru
        _
    $region24: #{srm_forward.2} parent=5 // pred_fallthru
      _
    %p222 = scmp.le.s32.totalorder 1, %s13
    %p223 = scmp.lt.s32.totalorder %s13, 4
    %p224 = pnand %p222, %p223
    %p225 = pneg %p224
    // Predicated region
    $region29: #{srm_forward.2} parent=5 // pred_check
      _
    $region30: #{srm_forward.2} parent=5 // pred_check_branch
      %227 = sbr.rel (%p224) target = $region32
    $region31: #{srm_forward.2} parent=5 // pred_region
      %s228 = ssub.s32 %s13, 1
      %p229 = pneg %p46
      %p230 = pneg %p43
      %p231 = pneg %p67
      %p232 = pneg %p64
      %s233 = smul.u32 %s22, 3
      %s234 = sadd.s32 %s233, %s23
      %s235 = sadd.s32 %s234, 1
      %s236 = smul.u32 2, %s235
      %p237 = scmp.lt.s32.totalorder %s236, 9
      %s238 = scalar_select %p237, %s236, 9
      %s239 = scalar_lea.vmem %s3, %s238
      %p240 = pneg %p99
      %p241 = pneg %p96
      %p242 = pneg %p131
      %p243 = pneg %p128
      %s244 = smul.u32 %s22, 3
      %s245 = sadd.s32 %s244, %s23
      %s246 = sadd.s32 %s245, 1
      %s247 = smul.u32 2, %s246
      %p248 = scmp.lt.s32.totalorder %s247, 9
      %s249 = scalar_select %p248, %s247, 9
      %s250 = smul.addr %s249, 8
      %s251 = scalar_lea.vmem %s4, %s250
      %p252 = pneg %p157
      %p253 = pneg %p154
      %p254 = scmp.lt.s32.totalorder %s22, 0
      %s255 = scalar_select %p254, %s22, 0
      %s256 = smul.addr %s255, 8
      %s257 = scalar_lea.vmem %s5, %s256
      %p258 = pneg %p183
      %p259 = pneg %p180
      %p260 = scmp.lt.s32.totalorder %s22, 0
      %s261 = scalar_select %p260, %s22, 0
      %s262 = smul.addr %s261, 8
      %s263 = scalar_lea.vmem %s6, %s262
      %s264 = smul.u32 %s22, 3
      %s265 = sadd.s32 %s264, %s23
      %s266 = sadd.s32 %s265, 1
      %s267 = smul.u32 2, %s266
      %p268 = scmp.lt.s32.totalorder %s267, 9
      %s269 = scalar_select %p268, %s267, 9
      %s270 = scalar_lea.vmem %s3, %s269
      %s271 = smul.u32 %s22, 3
      %s272 = sadd.s32 %s271, %s23
      %s273 = sadd.s32 %s272, 1
      %s274 = smul.u32 2, %s273
      %s275 = smul.u32 %s22, 3
      %s276 = sadd.s32 %s275, %s23
      %s277 = sadd.s32 %s276, 1
      %s278 = smul.u32 2, %s277
      %p279 = scmp.lt.s32.totalorder %s278, 9
      %s280 = scalar_select %p279, %s278, 9
      %s281 = smul.addr %s280, 8
      %s282 = scalar_lea.vmem %s4, %s281
      %s283 = smul.u32 %s22, 3
      %s284 = sadd.s32 %s283, %s23
      %s285 = sadd.s32 %s284, 1
      %s286 = smul.u32 2, %s285
      %p287 = scmp.lt.s32.totalorder %s22, 0
      %s288 = scalar_select %p287, %s22, 0
      %s289 = smul.addr %s288, 8
      %s290 = scalar_lea.vmem %s5, %s289
      %p291 = scmp.lt.s32.totalorder %s22, 0
      %s292 = scalar_select %p291, %s22, 0
      %s293 = smul.addr %s292, 8
      %s294 = scalar_lea.vmem %s6, %s293
      %s295 = smul.u32 %s22, 3
      %s296 = sadd.s32 %s295, %s23
      %p297 = scmp.lt.s32.totalorder %s23, 0
      %s298 = ssub.s32 0, %s23
      %s299 = scalar_select %p297, %s298, %s23
      %s300 = sand.u32 %s299, 1
      %s301 = ssub.s32 0, %s300
      %s302 = scalar_select %p297, %s301, %s300
      %p303 = scmp.ne.s32.totalorder %s302, 0
      %p304 = scmp.lt.s32.totalorder %s302, 0
      %p305 = pnand %p304, %p303
      %p306 = pneg %p305
      %s307 = sadd.s32 %s302, 2
      %s308 = scalar_select %p306, %s307, %s302
      %p309 = scmp.eq.s32.totalorder %s23, 0
      // Predicated region
      $region33: #{srm_forward.2} parent=31 // pred_check
        %p310 = pneg %p309
      $region34: #{srm_forward.2} parent=31 // pred_check_branch
        %312 = sbr.rel (%p310) target = $region36
      $region35: #{srm_forward.2} parent=31 // pred_region
        %s313 = smul.u32 %s296, 256
        %s314 = sshra.s32 %s313, 7
        %s315 = sand.u32 %s313, 127
        %s316 = smul.addr %s314, 8
        %s317 = scalar_lea.vmem %s0, %s316
        %s318 = smul.u32 %s308, 4
        %s319 = smul.addr %s318, 8
        %s320 = scalar_lea.vmem [#allocation2], %s319
        %s321 = scalar_lea.sflag [#allocation4], %s308
        %p323 = scmp.lt.u32.totalorder 32, 8
        %p324 = pneg %p323
        // Predicated region
        $region37: #{srm_forward.2} parent=35 // pred_check
          _
        $region38: #{srm_forward.2} parent=35 // pred_check_branch
          %326 = sbr.rel (%p323) target = $region40
        $region39: #{srm_forward.2} parent=35 // pred_region
          %s342 = sand.u32 32, 7
          %p343 = scmp.eq.s32.totalorder %s342, 0
          // Predicated region
          $region52: #{srm_forward.2} parent=39 // pred_check
            %p344 = pneg %p343
          $region53: #{srm_forward.2} parent=39 // pred_check_branch
            %346 = sbr.rel (%p344) target = $region55
          $region54: #{srm_forward.2} parent=39 // pred_region
            loop: start=0, step=1, limit=1
            $region56: #{srm_forward.2} parent=54 // loop_pre_header
              _
            $region57: #{srm_forward.2} parent=54 // loop_header
              %s348 = sphi 0, %s352
              %p349 = scmp.ge.s32.totalorder %s348, 1
              %s353 = sphi %s317, %s317
              %s354 = sphi %s320, %s320
            $region58: #{srm_forward.2} parent=54 // loop_header_branch
              %351 = sbr.rel (%p349) target = $region62
            $region59: #{srm_forward.2} parent=54 // loop_body
              %v355 = vld [vmem:[%s353] sm:$0xff]
              %356 = vst [vmem:[%s354] sm:$0xff] %v355
              %v357 = vld [vmem:[%s353 + $0x8] sm:$0xff]
              %358 = vst [vmem:[%s354 + $0x8] sm:$0xff] %v357
              %v359 = vld [vmem:[%s353 + $0x10] sm:$0xff]
              %360 = vst [vmem:[%s354 + $0x10] sm:$0xff] %v359
              %v361 = vld [vmem:[%s353 + $0x18] sm:$0xff]
              %362 = vst [vmem:[%s354 + $0x18] sm:$0xff] %v361
            $region60: #{srm_forward.2} parent=54 // loop_footer
              %s352 = sadd.s32 1, %s348
            $region61: #{srm_forward.2} parent=54 // loop_footer_branch
              %347 = sbr.rel target = $region57
            $region62: #{srm_forward.2} parent=54 // loop_exit
              _
          $region55: #{srm_forward.2} parent=39 // pred_fallthru
            _
          %p363 = pneg %p343
          // Predicated region
          $region63: #{srm_forward.2} parent=39 // pred_check
            _
          $region64: #{srm_forward.2} parent=39 // pred_check_branch
            %365 = sbr.rel (%p343) target = $region66
          $region65: #{srm_forward.2} parent=39 // pred_region
            %s366 = sand.u32 32, 7
          $region66: #{srm_forward.2} parent=39 // pred_fallthru
            _
        $region40: #{srm_forward.2} parent=35 // pred_fallthru
          _
        // Predicated region
        $region41: #{srm_forward.2} parent=35 // pred_check
          %p327 = pneg %p323
        $region42: #{srm_forward.2} parent=35 // pred_check_branch
          %329 = sbr.rel (%p327) target = $region44
        $region43: #{srm_forward.2} parent=35 // pred_region
          %s330 = sshll.u32 1, 32
          %s331 = ssub.s32 %s330, 1
          loop: start=0, step=1, limit=1
          $region45: #{srm_forward.2} parent=43 // loop_pre_header
            _
          $region46: #{srm_forward.2} parent=43 // loop_header
            %s333 = sphi 0, %s337
            %p334 = scmp.ge.s32.totalorder %s333, 1
            %s338 = sphi %s317, %s317
            %s339 = sphi %s320, %s320
          $region47: #{srm_forward.2} parent=43 // loop_header_branch
            %336 = sbr.rel (%p334) target = $region51
          $region48: #{srm_forward.2} parent=43 // loop_body
            %v340 = vld [vmem:[%s338] sm:%s331]
            %341 = vst [vmem:[%s339] sm:%s331] %v340
          $region49: #{srm_forward.2} parent=43 // loop_footer
            %s337 = sadd.s32 1, %s333
          $region50: #{srm_forward.2} parent=43 // loop_footer_branch
            %332 = sbr.rel target = $region46
          $region51: #{srm_forward.2} parent=43 // loop_exit
            _
        $region44: #{srm_forward.2} parent=35 // pred_fallthru
          _
        // Predicated region
        $region67: #{srm_forward.2} parent=35 // pred_check
          _
        $region68: #{srm_forward.2} parent=35 // pred_check_branch
          %369 = sbr.rel (0) target = $region70
        $region69: #{srm_forward.2} parent=35 // pred_region
          %370 = vsyncadd %s321, 512
        $region70: #{srm_forward.2} parent=35 // pred_fallthru
          _
      $region36: #{srm_forward.2} parent=31 // pred_fallthru
        _
      %s371 = sadd.s32 %s23, 1
      %p372 = scmp.lt.s32.totalorder %s371, 3
      // Predicated region
      $region71: #{srm_forward.2} parent=31 // pred_check
        %p373 = pneg %p372
      $region72: #{srm_forward.2} parent=31 // pred_check_branch
        %375 = sbr.rel (%p373) target = $region74
      $region73: #{srm_forward.2} parent=31 // pred_region
        %s376 = sadd.s32 %s296, 1
        %s377 = ssub.s32 1, %s308
        %s378 = smul.u32 %s376, 256
        %s379 = sshra.s32 %s378, 7
        %s380 = sand.u32 %s378, 127
        %s381 = smul.addr %s379, 8
        %s382 = scalar_lea.vmem %s0, %s381
        %s383 = smul.u32 %s377, 4
        %s384 = smul.addr %s383, 8
        %s385 = scalar_lea.vmem [#allocation2], %s384
        %s386 = scalar_lea.sflag [#allocation4], %s377
        %p388 = scmp.lt.u32.totalorder 32, 8
        %p389 = pneg %p388
        // Predicated region
        $region75: #{srm_forward.2} parent=73 // pred_check
          _
        $region76: #{srm_forward.2} parent=73 // pred_check_branch
          %391 = sbr.rel (%p388) target = $region78
        $region77: #{srm_forward.2} parent=73 // pred_region
          %s407 = sand.u32 32, 7
          %p408 = scmp.eq.s32.totalorder %s407, 0
          // Predicated region
          $region90: #{srm_forward.2} parent=77 // pred_check
            %p409 = pneg %p408
          $region91: #{srm_forward.2} parent=77 // pred_check_branch
            %411 = sbr.rel (%p409) target = $region93
          $region92: #{srm_forward.2} parent=77 // pred_region
            loop: start=0, step=1, limit=1
            $region94: #{srm_forward.2} parent=92 // loop_pre_header
              _
            $region95: #{srm_forward.2} parent=92 // loop_header
              %s413 = sphi 0, %s417
              %p414 = scmp.ge.s32.totalorder %s413, 1
              %s418 = sphi %s382, %s382
              %s419 = sphi %s385, %s385
            $region96: #{srm_forward.2} parent=92 // loop_header_branch
              %416 = sbr.rel (%p414) target = $region100
            $region97: #{srm_forward.2} parent=92 // loop_body
              %v420 = vld [vmem:[%s418] sm:$0xff]
              %421 = vst [vmem:[%s419] sm:$0xff] %v420
              %v422 = vld [vmem:[%s418 + $0x8] sm:$0xff]
              %423 = vst [vmem:[%s419 + $0x8] sm:$0xff] %v422
              %v424 = vld [vmem:[%s418 + $0x10] sm:$0xff]
              %425 = vst [vmem:[%s419 + $0x10] sm:$0xff] %v424
              %v426 = vld [vmem:[%s418 + $0x18] sm:$0xff]
              %427 = vst [vmem:[%s419 + $0x18] sm:$0xff] %v426
            $region98: #{srm_forward.2} parent=92 // loop_footer
              %s417 = sadd.s32 1, %s413
            $region99: #{srm_forward.2} parent=92 // loop_footer_branch
              %412 = sbr.rel target = $region95
            $region100: #{srm_forward.2} parent=92 // loop_exit
              _
          $region93: #{srm_forward.2} parent=77 // pred_fallthru
            _
          %p428 = pneg %p408
          // Predicated region
          $region101: #{srm_forward.2} parent=77 // pred_check
            _
          $region102: #{srm_forward.2} parent=77 // pred_check_branch
            %430 = sbr.rel (%p408) target = $region104
          $region103: #{srm_forward.2} parent=77 // pred_region
            %s431 = sand.u32 32, 7
          $region104: #{srm_forward.2} parent=77 // pred_fallthru
            _
        $region78: #{srm_forward.2} parent=73 // pred_fallthru
          _
        // Predicated region
        $region79: #{srm_forward.2} parent=73 // pred_check
          %p392 = pneg %p388
        $region80: #{srm_forward.2} parent=73 // pred_check_branch
          %394 = sbr.rel (%p392) target = $region82
        $region81: #{srm_forward.2} parent=73 // pred_region
          %s395 = sshll.u32 1, 32
          %s396 = ssub.s32 %s395, 1
          loop: start=0, step=1, limit=1
          $region83: #{srm_forward.2} parent=81 // loop_pre_header
            _
          $region84: #{srm_forward.2} parent=81 // loop_header
            %s398 = sphi 0, %s402
            %p399 = scmp.ge.s32.totalorder %s398, 1
            %s403 = sphi %s382, %s382
            %s404 = sphi %s385, %s385
          $region85: #{srm_forward.2} parent=81 // loop_header_branch
            %401 = sbr.rel (%p399) target = $region89
          $region86: #{srm_forward.2} parent=81 // loop_body
            %v405 = vld [vmem:[%s403] sm:%s396]
            %406 = vst [vmem:[%s404] sm:%s396] %v405
          $region87: #{srm_forward.2} parent=81 // loop_footer
            %s402 = sadd.s32 1, %s398
          $region88: #{srm_forward.2} parent=81 // loop_footer_branch
            %397 = sbr.rel target = $region84
          $region89: #{srm_forward.2} parent=81 // loop_exit
            _
        $region82: #{srm_forward.2} parent=73 // pred_fallthru
          _
        // Predicated region
        $region105: #{srm_forward.2} parent=73 // pred_check
          _
        $region106: #{srm_forward.2} parent=73 // pred_check_branch
          %434 = sbr.rel (0) target = $region108
        $region107: #{srm_forward.2} parent=73 // pred_region
          %435 = vsyncadd %s386, 512
        $region108: #{srm_forward.2} parent=73 // pred_fallthru
          _
      $region74: #{srm_forward.2} parent=31 // pred_fallthru
        _
      %s436 = smul.u32 %s296, 256
      %s437 = smul.u32 %s308, 4
      %s438 = smul.addr %s437, 8
      %s439 = scalar_lea.vmem [#allocation2], %s438
      %s440 = scalar_lea.sflag [#allocation4], %s308
      %s441 = smul.u32 8, 1
      %s442 = smul.u32 %s441, 4
      %s443 = sshll.u32 %s442, 4
      %444 = dma.done %s440, %s443
      %v445 = vld [vmem:[%s439] sm:$0xff]
      %v446 = vld [vmem:[%s439 + $0x8] sm:$0xff]
      %v447 = vld [vmem:[%s439 + $0x10] sm:$0xff]
      %v448 = vld [vmem:[%s439 + $0x18] sm:$0xff]
      %452 = vrot.lane.b32.xlu0 %v445, 19
      %v453 = vpop.permute.xlu0 %452
      %454 = vrot.lane.b32.xlu0 %v446, 19
      %v455 = vpop.permute.xlu0 %454
      %456 = vrot.lane.b32.xlu0 %v447, 19
      %v457 = vpop.permute.xlu0 %456
      %vm458 = vcmask 154624
      %v459 = vsel %vm458, %v453, %v455
      %v460 = vsel %vm458, %v455, %v457
      %463 = vst [vmem:[#allocation3] sm:$0xff] %v459
      %464 = vst [vmem:[#allocation3 + $0x8] sm:$0xff] %v460
      %465 = vrot.lane.b32.xlu0 %v445, 18
      %v466 = vpop.permute.xlu0 %465
      %467 = vrot.lane.b32.xlu0 %v446, 18
      %v468 = vpop.permute.xlu0 %467
      %469 = vrot.lane.b32.xlu0 %v447, 18
      %v470 = vpop.permute.xlu0 %469
      %vm471 = vcmask 146432
      %v472 = vsel %vm471, %v466, %v468
      %v473 = vsel %vm471, %v468, %v470
      %476 = vst [vmem:[#allocation3 + $0x10] sm:$0xff] %v472
      %477 = vst [vmem:[#allocation3 + $0x18] sm:$0xff] %v473
      %478 = vrot.lane.b32.xlu0 %v445, 17
      %v479 = vpop.permute.xlu0 %478
      %480 = vrot.lane.b32.xlu0 %v446, 17
      %v481 = vpop.permute.xlu0 %480
      %482 = vrot.lane.b32.xlu0 %v447, 17
      %v483 = vpop.permute.xlu0 %482
      %vm484 = vcmask 138240
      %v485 = vsel %vm484, %v479, %v481
      %v486 = vsel %vm484, %v481, %v483
      %489 = vst [vmem:[#allocation3 + $0x20] sm:$0xff] %v485
      %490 = vst [vmem:[#allocation3 + $0x28] sm:$0xff] %v486
      %491 = vrot.lane.b32.xlu0 %v445, 1
      %v492 = vpop.permute.xlu0 %491
      %493 = vrot.lane.b32.xlu0 %v446, 1
      %v494 = vpop.permute.xlu0 %493
      %495 = vrot.lane.b32.xlu0 %v447, 1
      %v496 = vpop.permute.xlu0 %495
      %vm497 = vcmask 7168
      %v498 = vsel %vm497, %v492, %v494
      %v499 = vsel %vm497, %v494, %v496
      %502 = vst [vmem:[#allocation3 + $0x30] sm:$0xff] %v498
      %503 = vst [vmem:[#allocation3 + $0x38] sm:$0xff] %v499
      %504 = vst [vmem:[#allocation3 + $0x40] sm:$0xff] %v446
      %505 = vst [vmem:[#allocation3 + $0x48] sm:$0xff] %v447
      %507 = vrot.lane.b32.xlu0 %v446, 127
      %v508 = vpop.permute.xlu0 %507
      %509 = vrot.lane.b32.xlu0 %v447, 127
      %v510 = vpop.permute.xlu0 %509
      %511 = vrot.lane.b32.xlu0 %v448, 127
      %v512 = vpop.permute.xlu0 %511
      %vm513 = vcmask 1039360
      %v514 = vsel %vm513, %v508, %v510
      %v515 = vsel %vm513, %v510, %v512
      %518 = vst [vmem:[#allocation3 + $0x50] sm:$0xff] %v514
      %519 = vst [vmem:[#allocation3 + $0x58] sm:$0xff] %v515
      %520 = vrot.lane.b32.xlu0 %v446, 111
      %v521 = vpop.permute.xlu0 %520
      %522 = vrot.lane.b32.xlu0 %v447, 111
      %v523 = vpop.permute.xlu0 %522
      %524 = vrot.lane.b32.xlu0 %v448, 111
      %v525 = vpop.permute.xlu0 %524
      %vm526 = vcmask 908288
      %v527 = vsel %vm526, %v521, %v523
      %v528 = vsel %vm526, %v523, %v525
      %531 = vst [vmem:[#allocation3 + $0x60] sm:$0xff] %v527
      %532 = vst [vmem:[#allocation3 + $0x68] sm:$0xff] %v528
      %533 = vrot.lane.b32.xlu0 %v446, 110
      %v534 = vpop.permute.xlu0 %533
      %535 = vrot.lane.b32.xlu0 %v447, 110
      %v536 = vpop.permute.xlu0 %535
      %537 = vrot.lane.b32.xlu0 %v448, 110
      %v538 = vpop.permute.xlu0 %537
      %vm539 = vcmask 900096
      %v540 = vsel %vm539, %v534, %v536
      %v541 = vsel %vm539, %v536, %v538
      %544 = vst [vmem:[#allocation3 + $0x70] sm:$0xff] %v540
      %545 = vst [vmem:[#allocation3 + $0x78] sm:$0xff] %v541
      %546 = vrot.lane.b32.xlu0 %v446, 109
      %v547 = vpop.permute.xlu0 %546
      %548 = vrot.lane.b32.xlu0 %v447, 109
      %v549 = vpop.permute.xlu0 %548
      %550 = vrot.lane.b32.xlu0 %v448, 109
      %v551 = vpop.permute.xlu0 %550
      %vm552 = vcmask 891904
      %v553 = vsel %vm552, %v547, %v549
      %v554 = vsel %vm552, %v549, %v551
      %557 = vst [vmem:[#allocation3 + $0x80] sm:$0xff] %v553
      %558 = vst [vmem:[#allocation3 + $0x88] sm:$0xff] %v554
      %v559 = vld [vmem:[%s1] sm:$0xff]
      %v560 = vld [vmem:[#allocation3] sm:$0xff]
      %v561 = vld [vmem:[#allocation3 + $0x8] sm:$0xff]
      %v562 = vld [vmem:[#allocation3 + $0x10] sm:$0xff]
      %v563 = vld [vmem:[#allocation3 + $0x18] sm:$0xff]
      %v564 = vld [vmem:[#allocation3 + $0x20] sm:$0xff]
      %v565 = vld [vmem:[#allocation3 + $0x28] sm:$0xff]
      %v566 = vld [vmem:[#allocation3 + $0x30] sm:$0xff]
      %v567 = vld [vmem:[#allocation3 + $0x38] sm:$0xff]
      %v568 = vld [vmem:[#allocation3 + $0x40] sm:$0xff]
      %v569 = vld [vmem:[#allocation3 + $0x48] sm:$0xff]
      %v570 = vld [vmem:[#allocation3 + $0x50] sm:$0xff]
      %v571 = vld [vmem:[#allocation3 + $0x58] sm:$0xff]
      %v572 = vld [vmem:[#allocation3 + $0x60] sm:$0xff]
      %v573 = vld [vmem:[#allocation3 + $0x68] sm:$0xff]
      %v574 = vld [vmem:[#allocation3 + $0x70] sm:$0xff]
      %v575 = vld [vmem:[#allocation3 + $0x78] sm:$0xff]
      %v576 = vld [vmem:[#allocation3 + $0x80] sm:$0xff]
      %v577 = vld [vmem:[#allocation3 + $0x88] sm:$0xff]
      %v578 = vld [vmem:[%s2] sm:$0xff]
      %580 = vset.pattern.permute.xlu0 0
      %581 = vperm.xlu0 %580, %v578
      %v582 = vpop.permute.xlu0 %581
      %vm584 = vcmask 588800
      %v586 = vsel %vm584, %v559, 0
      %588 = vmatprep.subr.mxu0 0.0
      %589 = vmatpush1.msra.mxu0 0.0
      %590 = vmatprep.subr.mxu0 0.0
      %591 = vmatpush1.msra.mxu0 0.0
      %592 = vmatprep.subr.mxu0 0.0
      %593 = vmatpush1.msra.mxu0 0.0
      %594 = vmatprep.subr.mxu0 0.0
      %595 = vmatpush1.msra.mxu0 0.0
      %596 = vmatprep.subr.mxu0 0.0
      %597 = vmatpush1.msra.mxu0 0.0
      %598 = vmatprep.subr.mxu0 0.0
      %599 = vmatpush1.msra.mxu0 0.0
      %600 = vmatprep.subr.mxu0 0.0
      %601 = vmatpush1.msra.mxu0 0.0
      %602 = vmatprep.subr.mxu0 %v577
      %603 = vmatpush1.msra.mxu0 %v576
      %604 = vmatprep.subr.mxu0 %v575
      %605 = vmatpush1.msra.mxu0 %v574
      %606 = vmatprep.subr.mxu0 %v573
      %607 = vmatpush1.msra.mxu0 %v572
      %608 = vmatprep.subr.mxu0 %v571
      %609 = vmatpush1.msra.mxu0 %v570
      %610 = vmatprep.subr.mxu0 %v569
      %611 = vmatpush1.msra.mxu0 %v568
      %612 = vmatprep.subr.mxu0 %v567
      %613 = vmatpush1.msra.mxu0 %v566
      %614 = vmatprep.subr.mxu0 %v565
      %615 = vmatpush1.msra.mxu0 %v564
      %616 = vmatprep.subr.mxu0 %v563
      %617 = vmatpush1.msra.mxu0 %v562
      %618 = vmatprep.subr.mxu0 %v561
      %619 = vmatpush1.msra.mxu0 %v560
      %620 = vmatprep.subr.mxu0 0.0
      %621 = vmatpush2.msra.mxu0 0.0
      %622 = vmatprep.subr.mxu0 0.0
      %623 = vmatpush2.msra.mxu0 0.0
      %624 = vmatprep.subr.mxu0 0.0
      %625 = vmatpush2.msra.mxu0 0.0
      %626 = vmatprep.subr.mxu0 0.0
      %627 = vmatpush2.msra.mxu0 0.0
      %628 = vmatprep.subr.mxu0 0.0
      %629 = vmatpush2.msra.mxu0 0.0
      %630 = vmatprep.subr.mxu0 0.0
      %631 = vmatpush2.msra.mxu0 0.0
      %632 = vmatprep.subr.mxu0 0.0
      %633 = vmatpush2.msra.mxu0 0.0
      %634 = vmatprep.subr.mxu0 0.0
      %635 = vmatpush2.msra.mxu0 0.0
      %636 = vmatprep.subr.mxu0 0.0
      %637 = vmatpush2.msra.mxu0 0.0
      %638 = vmatprep.subr.mxu0 0.0
      %639 = vmatpush2.msra.mxu0 0.0
      %640 = vmatprep.subr.mxu0 0.0
      %641 = vmatpush2.msra.mxu0 0.0
      %642 = vmatprep.subr.mxu0 0.0
      %643 = vmatpush2.msra.mxu0 0.0
      %644 = vmatprep.subr.mxu0 0.0
      %645 = vmatpush2.msra.mxu0 0.0
      %646 = vmatprep.subr.mxu0 0.0
      %647 = vmatpush2.msra.mxu0 0.0
      %648 = vmatprep.subr.mxu0 0.0
      %649 = vmatpush2.msra.mxu0 0.0
      %650 = vmatprep.subr.mxu0 0.0
      %651 = vmatpush2.msra.mxu0 0.0
      %652 = vmatprep.mubr.f32.mxu0 0.0
      %653 = vmatmul.mubr.f32.gmra.mxu0 %v586
      %v654 = vpop.f32.mrf.mxu0
      %v655 = vadd.f32 %v582, %v654
      %v656 = vpop.f32.mrf.mxu0
      %v657 = vadd.f32 %v582, %v656
      %658 = vdwg.mxu0
      %659 = vst [vmem:[%s282] sm:$0xff] %v655
      %660 = vst [vmem:[%s282 + $0x8] sm:$0xff] %v657
      // Predicated region
      $region109: #{srm_forward.2} parent=31 // pred_check
        %p661 = pneg %p309
      $region110: #{srm_forward.2} parent=31 // pred_check_branch
        %663 = sbr.rel (%p661) target = $region112
      $region111: #{srm_forward.2} parent=31 // pred_region
        %664 = vst.msk [vmem:[%s290] sm:$0xff] %vm497, 0.0
        %665 = vst.msk [vmem:[%s294] sm:$0xff] %vm497, 0.0
      $region112: #{srm_forward.2} parent=31 // pred_fallthru
        _
      %v666 = vld [vmem:[%s270] sm:$0x3]
      %v668 = vlaneseq
      %v669 = vshrl.u32 %v668, 7
      %v670 = vsub.s32 0, %v669
      %v671 = vrot.slane %v666, %v670
      %v672 = vlaneseq
      %v673 = vshrl.u32 %v672, 7
      %v674 = vsub.s32 1, %v673
      %v675 = vrot.slane %v666, %v674
      %v678 = vmul.f32 %v655, %v671
      %v679 = vmul.f32 %v657, %v675
      %v680 = vld [vmem:[%s290] sm:$0xff]
      %v681 = vadd.f32 %v678, %v679
      %682 = vadd.xlane.f32.xlu0 %v681
      %v683 = vpop.xlane.xlu0 %682
      %v684 = vadd.f32 %v680, %v683
      %685 = vst.msk [vmem:[%s290] sm:$0xff] %vm497, %v684
      %v686 = vld [vmem:[%s294] sm:$0xff]
      %v687 = vmul.f32 %v678, %v655
      %v688 = vmul.f32 %v679, %v657
      %v689 = vadd.f32 %v687, %v688
      %690 = vadd.xlane.f32.xlu0 %v689
      %v691 = vpop.xlane.xlu0 %690
      %v692 = vadd.f32 %v686, %v691
      %693 = vst.msk [vmem:[%s294] sm:$0xff] %vm497, %v692
      %s694 = smul.u32 %s22, 3
      %s695 = sadd.s32 %s694, %s23
      %s696 = sadd.s32 %s695, 1
      %s697 = smul.u32 2, %s696
      %p698 = scmp.lt.s32.totalorder %s697, 9
      %s699 = scalar_select %p698, %s697, 9
      %s700 = smul.addr %s699, 8
      %s701 = scalar_lea.vmem %s4, %s700
      %p702 = scmp.lt.s32.totalorder %s22, 0
      %s703 = scalar_select %p702, %s22, 0
      %s704 = smul.addr %s703, 8
      %s705 = scalar_lea.vmem %s5, %s704
      %p706 = scmp.lt.s32.totalorder %s22, 0
      %s707 = scalar_select %p706, %s22, 0
      %s708 = smul.addr %s707, 8
      %s709 = scalar_lea.vmem %s6, %s708
      // Predicated region
      $region113: #{srm_forward.2} parent=31 // pred_check
        %p710 = pneg %p128
      $region114: #{srm_forward.2} parent=31 // pred_check_branch
        %712 = sbr.rel (%p710) target = $region116
      $region115: #{srm_forward.2} parent=31 // pred_region
        %s713 = smul.u32 %s22, 3
        %s714 = sadd.s32 %s713, %s23
        %s715 = sadd.s32 %s714, 1
        %s716 = smul.u32 2, %s715
      $region116: #{srm_forward.2} parent=31 // pred_fallthru
        _
      // Predicated region
      $region117: #{srm_forward.2} parent=31 // pred_check
        %p717 = pneg %p154
      $region118: #{srm_forward.2} parent=31 // pred_check_branch
        %719 = sbr.rel (%p717) target = $region120
      $region119: #{srm_forward.2} parent=31 // pred_region
        _
      $region120: #{srm_forward.2} parent=31 // pred_fallthru
        _
      // Predicated region
      $region121: #{srm_forward.2} parent=31 // pred_check
        %p720 = pneg %p180
      $region122: #{srm_forward.2} parent=31 // pred_check_branch
        %722 = sbr.rel (%p720) target = $region124
      $region123: #{srm_forward.2} parent=31 // pred_region
        _
      $region124: #{srm_forward.2} parent=31 // pred_fallthru
        _
      // Predicated region
      $region125: #{srm_forward.2} parent=31 // pred_check
        %p723 = pneg %p154
      $region126: #{srm_forward.2} parent=31 // pred_check_branch
        %725 = sbr.rel (%p723) target = $region128
      $region127: #{srm_forward.2} parent=31 // pred_region
        %p726 = scmp.lt.s32.totalorder %s22, 0
        %s727 = scalar_select %p726, %s22, 0
        %s728 = smul.addr %s727, 8
        %s729 = scalar_lea.vmem %s5, %s728
      $region128: #{srm_forward.2} parent=31 // pred_fallthru
        _
      // Predicated region
      $region129: #{srm_forward.2} parent=31 // pred_check
        %p730 = pneg %p180
      $region130: #{srm_forward.2} parent=31 // pred_check_branch
        %732 = sbr.rel (%p730) target = $region132
      $region131: #{srm_forward.2} parent=31 // pred_region
        %p733 = scmp.lt.s32.totalorder %s22, 0
        %s734 = scalar_select %p733, %s22, 0
        %s735 = smul.addr %s734, 8
        %s736 = scalar_lea.vmem %s6, %s735
      $region132: #{srm_forward.2} parent=31 // pred_fallthru
        _
    $region32: #{srm_forward.2} parent=5 // pred_fallthru
      _
    %p737 = scmp.le.s32.totalorder 2, %s13
    // Predicated region
    $region133: #{srm_forward.2} parent=5 // pred_check
      %p738 = pneg %p737
    $region134: #{srm_forward.2} parent=5 // pred_check_branch
      %740 = sbr.rel (%p738) target = $region136
    $region135: #{srm_forward.2} parent=5 // pred_region
      %s741 = ssub.s32 %s13, 2
      // Predicated region
      $region137: #{srm_forward.2} parent=135 // pred_check
        %p742 = pneg %p134
      $region138: #{srm_forward.2} parent=135 // pred_check_branch
        %744 = sbr.rel (%p742) target = $region140
      $region139: #{srm_forward.2} parent=135 // pred_region
        %s745 = smul.u32 %s24, 3
        %s746 = sadd.s32 %s745, %s25
        %s747 = sadd.s32 %s746, 1
        %s748 = smul.u32 2, %s747
        %p749 = scmp.lt.s32.totalorder %s748, 9
        %s750 = scalar_select %p749, %s748, 9
        %s751 = smul.addr %s750, 8
        %s752 = scalar_lea.vmem %s4, %s751
      $region140: #{srm_forward.2} parent=135 // pred_fallthru
        _
    $region136: #{srm_forward.2} parent=5 // pred_fallthru
      _
  $region6: #{srm_forward.2} parent=0 // loop_footer
    %s17 = sadd.s32 1, %s13
  $region7: #{srm_forward.2} parent=0 // loop_footer_branch
    %12 = sbr.rel target = $region3
  $region8: #{srm_forward.2} parent=0 // loop_exit
    _
  %753 = vsyncmov [#allocation4]
  %s754 = vpop.sfrf %753
  %p755 = scmp.eq.s32.totalorder %s754, 0
  %p756 = pneg %p755
  %758 = shalt.err (%p756)
  %s759 = scalar_lea.sflag [#allocation4], 1
  %760 = vsyncmov %s759
  %s761 = vpop.sfrf %760
  %p762 = scmp.eq.s32.totalorder %s761, 0
  %p763 = pneg %p762
  %765 = shalt.err (%p763)

// kernel: srm_forward.3
$region0: #{srm_forward.3}
  #allocation0 [shape = 'u32[]', space=smem, size = 0x4, offset = 0x4, fixed_abs, tag = 'smem constant byte address 0x4 - core index']
  #allocation1 [shape = 'u32[144,128]{1,0:T(1,128)}', space=vmem, size = 0x12000, scoped, tag = 'internal scratch']
  #allocation2 [shape = 'f32[2,8,512]{2,1,0:T(8,128)}', space=vmem, size = 0x8000, scoped, tag = 'scratch operand']
  #allocation3 [shape = 'f32[2,1,512]{2,1,0:T(1,128)}', space=vmem, size = 0x1000, scoped, tag = 'scratch operand']
  #allocation4 [shape = 'f32[72,256]{1,0:T(8,128)}', space=vmem, size = 0x12000, scoped, tag = 'scratch operand']
  #allocation5 [shape = 's32[2]{0}', space=sflag, size = 0x8, scoped, tag = 'scratch operand']
  #allocation6 [shape = 's32[2]{0}', space=sflag, size = 0x8, scoped, tag = 'scratch operand']
  #allocation7 [shape = 's32[]', space=sflag, size = 0x4, offset = 0, fixed_abs, tag = 'sflag constant byte address 0x0 - dummy sync flag']
  #allocation8 [shape = 's32[]', space=sflag, size = 0x4, offset = 0, fixed_abs, tag = 'sflag constant byte address 0x0 - dummy sync flag']
  #allocation9 [shape = 's32[]', space=sflag, size = 0x4, offset = 0, fixed_abs, tag = 'sflag constant byte address 0x0 - dummy sync flag']
  #allocation10 [shape = 's32[]', space=sflag, size = 0x4, offset = 0, fixed_abs, tag = 'sflag constant byte address 0x0 - dummy sync flag']
  %s0 = inlined_call_operand.vmem [shape: f32[8,1280], index: 0, kind: input, shape index: {}]
  %s1 = inlined_call_operand.vmem [shape: f32[1,1280], index: 1, kind: input, shape index: {}]
  %s2 = inlined_call_operand.vmem [shape: f32[16,72], index: 2, kind: input, shape index: {}]
  %s3 = inlined_call_operand.vmem [shape: f32[16,1], index: 3, kind: input, shape index: {}]
  %s4 = inlined_call_operand.vmem [shape: f32[8,1], index: 4, kind: input, shape index: {}]
  %s5 = inlined_call_operand.vmem [shape: f32[8,1], index: 5, kind: input, shape index: {}]
  %s6 = inlined_call_operand.vmem [shape: f32[8,768], index: 6, kind: output, shape index: {}]
  %s7 = sld [smem:[#allocation0]]
  $region185: #{srm_forward.3} parent=0
    _
  %s9 = ssub.s32 1, %s7
  %s10 = scalar_select 0, %s9, %s7
  loop: start=0, step=1, limit=5
  $region2: #{srm_forward.3} parent=0 // loop_pre_header
    _
  $region3: #{srm_forward.3} parent=0 // loop_header
    %s12 = sphi 0, %s16
    %p13 = scmp.ge.s32.totalorder %s12, 5
    %s19 = sphi 0, %s31
    %s20 = sphi 0, %s27
    %s21 = sphi 0, %s19
    %s22 = sphi 0, %s20
    %s23 = sphi 0, %s21
    %s24 = sphi 0, %s22
    %s32 = sphi 0, %s32
    %s34 = sphi 0, %s32
    %s35 = sphi 0, %s34
    %s49 = sphi 0, %s35
    %s53 = sphi 0, %s53
    %s55 = sphi 0, %s53
    %s56 = sphi 0, %s55
    %s70 = sphi 0, %s56
    %s74 = sphi 0, %s74
    %s76 = sphi 0, %s74
    %s77 = sphi 0, %s76
    %s91 = sphi 0, %s77
    %s95 = sphi 0, %s95
    %s97 = sphi 0, %s95
    %s98 = sphi 0, %s97
    %s112 = sphi 0, %s98
    %s122 = sphi 0, %s124
    %s125 = sphi 0, %s122
    %s126 = sphi 0, %s125
    %s142 = sphi 0, %s126
  $region4: #{srm_forward.3} parent=0 // loop_header_branch
    %15 = sbr.rel (%p13) target = $region8
  $region5: #{srm_forward.3} parent=0 // loop_body
    %s17 = ssub.s32 %s12, 1
    %s18 = ssub.s32 %s12, 2
    %s25 = sadd.s32 1, %s20
    %p26 = scmp.ge.s32.totalorder %s25, 3
    %s27 = scalar_select %p26, 0, %s25
    %s28 = sadd.s32 1, %s19
    %s29 = scalar_select %p26, %s28, %s19
    %p30 = scmp.ge.s32.totalorder %s29, 1
    %s31 = scalar_select %p30, 0, %s29
    %s33 = sadd.s32 %s32, 1
    %p36 = scmp.eq.s32.totalorder %s12, 2
    %p37 = scmp.ne.s32.totalorder %s32, %s34
    %p38 = scmp.eq.s32.totalorder %s12, 0
    %p39 = por %p37, %p38
    %p40 = scmp.ne.s32.totalorder %s32, %s34
    %p41 = scmp.eq.s32.totalorder %s17, 2
    %p42 = por %p40, %p41
    %p43 = scmp.ne.s32.totalorder %s34, %s35
    %p44 = scmp.eq.s32.totalorder %s17, 0
    %p45 = por %p43, %p44
    %p46 = scmp.ne.s32.totalorder %s34, %s35
    %p47 = scmp.eq.s32.totalorder %s18, 2
    %p48 = por %p46, %p47
    %p50 = scmp.ne.s32.totalorder %s35, %s49
    %p51 = scmp.eq.s32.totalorder %s18, 0
    %p52 = por %p50, %p51
    %s54 = sadd.s32 %s53, 1
    %p57 = scmp.eq.s32.totalorder %s12, 2
    %p58 = scmp.ne.s32.totalorder %s53, %s55
    %p59 = scmp.eq.s32.totalorder %s12, 0
    %p60 = por %p58, %p59
    %p61 = scmp.ne.s32.totalorder %s53, %s55
    %p62 = scmp.eq.s32.totalorder %s17, 2
    %p63 = por %p61, %p62
    %p64 = scmp.ne.s32.totalorder %s55, %s56
    %p65 = scmp.eq.s32.totalorder %s17, 0
    %p66 = por %p64, %p65
    %p67 = scmp.ne.s32.totalorder %s55, %s56
    %p68 = scmp.eq.s32.totalorder %s18, 2
    %p69 = por %p67, %p68
    %p71 = scmp.ne.s32.totalorder %s56, %s70
    %p72 = scmp.eq.s32.totalorder %s18, 0
    %p73 = por %p71, %p72
    %s75 = sadd.s32 %s74, 1
    %p78 = scmp.eq.s32.totalorder %s12, 2
    %p79 = scmp.ne.s32.totalorder %s74, %s76
    %p80 = scmp.eq.s32.totalorder %s12, 0
    %p81 = por %p79, %p80
    %p82 = scmp.ne.s32.totalorder %s74, %s76
    %p83 = scmp.eq.s32.totalorder %s17, 2
    %p84 = por %p82, %p83
    %p85 = scmp.ne.s32.totalorder %s76, %s77
    %p86 = scmp.eq.s32.totalorder %s17, 0
    %p87 = por %p85, %p86
    %p88 = scmp.ne.s32.totalorder %s76, %s77
    %p89 = scmp.eq.s32.totalorder %s18, 2
    %p90 = por %p88, %p89
    %p92 = scmp.ne.s32.totalorder %s77, %s91
    %p93 = scmp.eq.s32.totalorder %s18, 0
    %p94 = por %p92, %p93
    %s96 = sadd.s32 %s95, 1
    %p99 = scmp.eq.s32.totalorder %s12, 2
    %p100 = scmp.ne.s32.totalorder %s95, %s97
    %p101 = scmp.eq.s32.totalorder %s12, 0
    %p102 = por %p100, %p101
    %p103 = scmp.ne.s32.totalorder %s95, %s97
    %p104 = scmp.eq.s32.totalorder %s17, 2
    %p105 = por %p103, %p104
    %p106 = scmp.ne.s32.totalorder %s97, %s98
    %p107 = scmp.eq.s32.totalorder %s17, 0
    %p108 = por %p106, %p107
    %p109 = scmp.ne.s32.totalorder %s97, %s98
    %p110 = scmp.eq.s32.totalorder %s18, 2
    %p111 = por %p109, %p110
    %p113 = scmp.ne.s32.totalorder %s98, %s112
    %p114 = scmp.eq.s32.totalorder %s18, 0
    %p115 = por %p113, %p114
    %s116 = smul.u32 %s19, 3
    %s117 = sadd.s32 %s116, %s20
    %s118 = smul.u32 %s31, 3
    %s119 = sadd.s32 %s118, %s27
    %s120 = ssub.s32 %s117, %s119
    %p121 = scmp.eq.s32.totalorder %s120, 0
    %s123 = sadd.s32 %s122, 1
    %s124 = scalar_select %p121, %s122, %s123
    %p127 = pneg %p121
    %p128 = scmp.eq.s32.totalorder %s12, 2
    %p129 = por %p127, %p128
    %p130 = scmp.ne.s32.totalorder %s122, %s125
    %p131 = scmp.eq.s32.totalorder %s12, 0
    %p132 = por %p130, %p131
    %p133 = scmp.ne.s32.totalorder %s122, %s125
    %p134 = scmp.eq.s32.totalorder %s17, 2
    %p135 = por %p133, %p134
    %p136 = scmp.ne.s32.totalorder %s125, %s126
    %p137 = scmp.eq.s32.totalorder %s17, 0
    %p138 = por %p136, %p137
    %p139 = scmp.ne.s32.totalorder %s125, %s126
    %p140 = scmp.eq.s32.totalorder %s18, 2
    %p141 = por %p139, %p140
    %p143 = scmp.ne.s32.totalorder %s126, %s142
    %p144 = scmp.eq.s32.totalorder %s18, 0
    %p145 = por %p143, %p144
    %p146 = scmp.le.s32.totalorder 1, %s12
    %p147 = scmp.lt.s32.totalorder %s12, 4
    %p148 = pnand %p146, %p147
    %p149 = pneg %p148
    // Predicated region
    $region9: #{srm_forward.3} parent=5 // pred_check
      _
    $region10: #{srm_forward.3} parent=5 // pred_check_branch
      %151 = sbr.rel (%p148) target = $region12
    $region11: #{srm_forward.3} parent=5 // pred_region
      %s152 = ssub.s32 %s12, 1
      // Predicated region
      $region13: #{srm_forward.3} parent=11 // pred_check
        %p153 = pneg %p45
      $region14: #{srm_forward.3} parent=11 // pred_check_branch
        %155 = sbr.rel (%p153) target = $region16
      $region15: #{srm_forward.3} parent=11 // pred_region
        _
      $region16: #{srm_forward.3} parent=11 // pred_fallthru
        _
      // Predicated region
      $region17: #{srm_forward.3} parent=11 // pred_check
        %p156 = pneg %p66
      $region18: #{srm_forward.3} parent=11 // pred_check_branch
        %158 = sbr.rel (%p156) target = $region20
      $region19: #{srm_forward.3} parent=11 // pred_region
        _
      $region20: #{srm_forward.3} parent=11 // pred_fallthru
        _
      // Predicated region
      $region21: #{srm_forward.3} parent=11 // pred_check
        %p159 = pneg %p87
      $region22: #{srm_forward.3} parent=11 // pred_check_branch
        %161 = sbr.rel (%p159) target = $region24
      $region23: #{srm_forward.3} parent=11 // pred_region
        _
      $region24: #{srm_forward.3} parent=11 // pred_fallthru
        _
      // Predicated region
      $region25: #{srm_forward.3} parent=11 // pred_check
        %p162 = pneg %p108
      $region26: #{srm_forward.3} parent=11 // pred_check_branch
        %164 = sbr.rel (%p162) target = $region28
      $region27: #{srm_forward.3} parent=11 // pred_region
        _
      $region28: #{srm_forward.3} parent=11 // pred_fallthru
        _
    $region12: #{srm_forward.3} parent=5 // pred_fallthru
      _
    %p165 = scmp.lt.s32.totalorder %s12, 3
    // Predicated region
    $region29: #{srm_forward.3} parent=5 // pred_check
      %p166 = pneg %p165
    $region30: #{srm_forward.3} parent=5 // pred_check_branch
      %168 = sbr.rel (%p166) target = $region32
    $region31: #{srm_forward.3} parent=5 // pred_region
      _
    $region32: #{srm_forward.3} parent=5 // pred_fallthru
      _
    %p169 = scmp.le.s32.totalorder 1, %s12
    %p170 = scmp.lt.s32.totalorder %s12, 4
    %p171 = pnand %p169, %p170
    %p172 = pneg %p171
    // Predicated region
    $region33: #{srm_forward.3} parent=5 // pred_check
      _
    $region34: #{srm_forward.3} parent=5 // pred_check_branch
      %174 = sbr.rel (%p171) target = $region36
    $region35: #{srm_forward.3} parent=5 // pred_region
      %s175 = ssub.s32 %s12, 1
      %p176 = pneg %p45
      %p177 = pneg %p42
      %p178 = pneg %p66
      %p179 = pneg %p63
      %p180 = pneg %p87
      %p181 = pneg %p84
      %p182 = pneg %p108
      %p183 = pneg %p105
      %p184 = pneg %p138
      %p185 = pneg %p135
      %s186 = smul.u32 %s21, 3
      %s187 = sadd.s32 %s186, %s22
      %s188 = smul.u32 2, %s187
      %p189 = scmp.lt.s32.totalorder %s188, 5
      %s190 = scalar_select %p189, %s188, 5
      %s191 = smul.addr %s190, 8
      %s192 = scalar_lea.vmem %s6, %s191
      %s193 = smul.u32 %s21, 3
      %s194 = sadd.s32 %s193, %s22
      %s195 = smul.u32 2, %s194
      %p196 = scmp.lt.s32.totalorder %s195, 5
      %s197 = scalar_select %p196, %s195, 5
      %s198 = smul.addr %s197, 8
      %s199 = scalar_lea.vmem %s6, %s198
      %s200 = smul.u32 %s21, 3
      %s201 = sadd.s32 %s200, %s22
      %s202 = smul.u32 2, %s201
      %s203 = smul.u32 %s21, 3
      %s204 = sadd.s32 %s203, %s22
      %p205 = scmp.lt.s32.totalorder %s22, 0
      %s206 = ssub.s32 0, %s22
      %s207 = scalar_select %p205, %s206, %s22
      %s208 = sand.u32 %s207, 1
      %s209 = ssub.s32 0, %s208
      %s210 = scalar_select %p205, %s209, %s208
      %p211 = scmp.ne.s32.totalorder %s210, 0
      %p212 = scmp.lt.s32.totalorder %s210, 0
      %p213 = pnand %p212, %p211
      %p214 = pneg %p213
      %s215 = sadd.s32 %s210, 2
      %s216 = scalar_select %p214, %s215, %s210
      %p217 = scmp.eq.s32.totalorder %s22, 0
      // Predicated region
      $region37: #{srm_forward.3} parent=35 // pred_check
        %p218 = pneg %p217
      $region38: #{srm_forward.3} parent=35 // pred_check_branch
        %220 = sbr.rel (%p218) target = $region40
      $region39: #{srm_forward.3} parent=35 // pred_region
        %s221 = smul.u32 %s204, 256
        %s222 = sadd.s32 %s221, 128
        %s223 = sshra.s32 %s222, 7
        %s224 = sand.u32 %s222, 127
        %s225 = smul.addr %s223, 8
        %s226 = scalar_lea.vmem %s0, %s225
        %s227 = smul.u32 %s216, 4
        %s228 = smul.addr %s227, 8
        %s229 = scalar_lea.vmem [#allocation2], %s228
        %s230 = scalar_lea.sflag [#allocation5], %s216
        %p232 = scmp.lt.u32.totalorder 32, 8
        %p233 = pneg %p232
        // Predicated region
        $region41: #{srm_forward.3} parent=39 // pred_check
          _
        $region42: #{srm_forward.3} parent=39 // pred_check_branch
          %235 = sbr.rel (%p232) target = $region44
        $region43: #{srm_forward.3} parent=39 // pred_region
          %s251 = sand.u32 32, 7
          %p252 = scmp.eq.s32.totalorder %s251, 0
          // Predicated region
          $region56: #{srm_forward.3} parent=43 // pred_check
            %p253 = pneg %p252
          $region57: #{srm_forward.3} parent=43 // pred_check_branch
            %255 = sbr.rel (%p253) target = $region59
          $region58: #{srm_forward.3} parent=43 // pred_region
            loop: start=0, step=1, limit=1
            $region60: #{srm_forward.3} parent=58 // loop_pre_header
              _
            $region61: #{srm_forward.3} parent=58 // loop_header
              %s257 = sphi 0, %s261
              %p258 = scmp.ge.s32.totalorder %s257, 1
              %s262 = sphi %s226, %s226
              %s263 = sphi %s229, %s229
            $region62: #{srm_forward.3} parent=58 // loop_header_branch
              %260 = sbr.rel (%p258) target = $region66
            $region63: #{srm_forward.3} parent=58 // loop_body
              %v264 = vld [vmem:[%s262] sm:$0xff]
              %265 = vst [vmem:[%s263] sm:$0xff] %v264
              %v266 = vld [vmem:[%s262 + $0x8] sm:$0xff]
              %267 = vst [vmem:[%s263 + $0x8] sm:$0xff] %v266
              %v268 = vld [vmem:[%s262 + $0x10] sm:$0xff]
              %269 = vst [vmem:[%s263 + $0x10] sm:$0xff] %v268
              %v270 = vld [vmem:[%s262 + $0x18] sm:$0xff]
              %271 = vst [vmem:[%s263 + $0x18] sm:$0xff] %v270
            $region64: #{srm_forward.3} parent=58 // loop_footer
              %s261 = sadd.s32 1, %s257
            $region65: #{srm_forward.3} parent=58 // loop_footer_branch
              %256 = sbr.rel target = $region61
            $region66: #{srm_forward.3} parent=58 // loop_exit
              _
          $region59: #{srm_forward.3} parent=43 // pred_fallthru
            _
          %p272 = pneg %p252
          // Predicated region
          $region67: #{srm_forward.3} parent=43 // pred_check
            _
          $region68: #{srm_forward.3} parent=43 // pred_check_branch
            %274 = sbr.rel (%p252) target = $region70
          $region69: #{srm_forward.3} parent=43 // pred_region
            %s275 = sand.u32 32, 7
          $region70: #{srm_forward.3} parent=43 // pred_fallthru
            _
        $region44: #{srm_forward.3} parent=39 // pred_fallthru
          _
        // Predicated region
        $region45: #{srm_forward.3} parent=39 // pred_check
          %p236 = pneg %p232
        $region46: #{srm_forward.3} parent=39 // pred_check_branch
          %238 = sbr.rel (%p236) target = $region48
        $region47: #{srm_forward.3} parent=39 // pred_region
          %s239 = sshll.u32 1, 32
          %s240 = ssub.s32 %s239, 1
          loop: start=0, step=1, limit=1
          $region49: #{srm_forward.3} parent=47 // loop_pre_header
            _
          $region50: #{srm_forward.3} parent=47 // loop_header
            %s242 = sphi 0, %s246
            %p243 = scmp.ge.s32.totalorder %s242, 1
            %s247 = sphi %s226, %s226
            %s248 = sphi %s229, %s229
          $region51: #{srm_forward.3} parent=47 // loop_header_branch
            %245 = sbr.rel (%p243) target = $region55
          $region52: #{srm_forward.3} parent=47 // loop_body
            %v249 = vld [vmem:[%s247] sm:%s240]
            %250 = vst [vmem:[%s248] sm:%s240] %v249
          $region53: #{srm_forward.3} parent=47 // loop_footer
            %s246 = sadd.s32 1, %s242
          $region54: #{srm_forward.3} parent=47 // loop_footer_branch
            %241 = sbr.rel target = $region50
          $region55: #{srm_forward.3} parent=47 // loop_exit
            _
        $region48: #{srm_forward.3} parent=39 // pred_fallthru
          _
        // Predicated region
        $region71: #{srm_forward.3} parent=39 // pred_check
          _
        $region72: #{srm_forward.3} parent=39 // pred_check_branch
          %278 = sbr.rel (0) target = $region74
        $region73: #{srm_forward.3} parent=39 // pred_region
          %279 = vsyncadd %s230, 512
        $region74: #{srm_forward.3} parent=39 // pred_fallthru
          _
        %s280 = scalar_lea.vmem %s1, %s223
        %s281 = scalar_lea.vmem [#allocation3], %s227
        %s282 = scalar_lea.sflag [#allocation6], %s216
        %p284 = scmp.lt.u32.totalorder 4, 8
        %p285 = pneg %p284
        // Predicated region
        $region75: #{srm_forward.3} parent=39 // pred_check
          _
        $region76: #{srm_forward.3} parent=39 // pred_check_branch
          %287 = sbr.rel (%p284) target = $region78
        $region77: #{srm_forward.3} parent=39 // pred_region
          %s303 = sand.u32 4, 7
          %p304 = scmp.eq.s32.totalorder %s303, 0
          %p305 = pneg %p304
          // Predicated region
          $region90: #{srm_forward.3} parent=77 // pred_check
            _
          $region91: #{srm_forward.3} parent=77 // pred_check_branch
            %307 = sbr.rel (%p304) target = $region93
          $region92: #{srm_forward.3} parent=77 // pred_region
            %s308 = sand.u32 4, 7
            %s309 = ssub.s32 4, %s308
            %s310 = scalar_lea.vmem %s280, %s309
            %s311 = ssub.s32 4, %s308
            %s312 = scalar_lea.vmem %s281, %s311 [#allocation3]
            %s313 = sshll.u32 1, %s308
            %s314 = ssub.s32 %s313, 1
            loop: start=0, step=1, limit=1
            $region94: #{srm_forward.3} parent=92 // loop_pre_header
              _
            $region95: #{srm_forward.3} parent=92 // loop_header
              %s316 = sphi 0, %s320
              %p317 = scmp.ge.s32.totalorder %s316, 1
              %s321 = sphi %s310, %s310
              %s322 = sphi %s312, %s312
            $region96: #{srm_forward.3} parent=92 // loop_header_branch
              %319 = sbr.rel (%p317) target = $region100
            $region97: #{srm_forward.3} parent=92 // loop_body
              %v323 = vld [vmem:[%s321] sm:%s314]
              %324 = vst [vmem:[%s322] sm:%s314] %v323
            $region98: #{srm_forward.3} parent=92 // loop_footer
              %s320 = sadd.s32 1, %s316
            $region99: #{srm_forward.3} parent=92 // loop_footer_branch
              %315 = sbr.rel target = $region95
            $region100: #{srm_forward.3} parent=92 // loop_exit
              _
          $region93: #{srm_forward.3} parent=77 // pred_fallthru
            _
        $region78: #{srm_forward.3} parent=39 // pred_fallthru
          _
        // Predicated region
        $region79: #{srm_forward.3} parent=39 // pred_check
          %p288 = pneg %p284
        $region80: #{srm_forward.3} parent=39 // pred_check_branch
          %290 = sbr.rel (%p288) target = $region82
        $region81: #{srm_forward.3} parent=39 // pred_region
          %s291 = sshll.u32 1, 4
          %s292 = ssub.s32 %s291, 1
          loop: start=0, step=1, limit=1
          $region83: #{srm_forward.3} parent=81 // loop_pre_header
            _
          $region84: #{srm_forward.3} parent=81 // loop_header
            %s294 = sphi 0, %s298
            %p295 = scmp.ge.s32.totalorder %s294, 1
            %s299 = sphi %s280, %s280
            %s300 = sphi %s281, %s281
          $region85: #{srm_forward.3} parent=81 // loop_header_branch
            %297 = sbr.rel (%p295) target = $region89
          $region86: #{srm_forward.3} parent=81 // loop_body
            %v301 = vld [vmem:[%s299] sm:%s292]
            %302 = vst [vmem:[%s300] sm:%s292] %v301
          $region87: #{srm_forward.3} parent=81 // loop_footer
            %s298 = sadd.s32 1, %s294
          $region88: #{srm_forward.3} parent=81 // loop_footer_branch
            %293 = sbr.rel target = $region84
          $region89: #{srm_forward.3} parent=81 // loop_exit
            _
        $region82: #{srm_forward.3} parent=39 // pred_fallthru
          _
        // Predicated region
        $region101: #{srm_forward.3} parent=39 // pred_check
          _
        $region102: #{srm_forward.3} parent=39 // pred_check_branch
          %327 = sbr.rel (0) target = $region104
        $region103: #{srm_forward.3} parent=39 // pred_region
          %328 = vsyncadd %s282, 64
        $region104: #{srm_forward.3} parent=39 // pred_fallthru
          _
      $region40: #{srm_forward.3} parent=35 // pred_fallthru
        _
      %s329 = sadd.s32 %s22, 1
      %p330 = scmp.lt.s32.totalorder %s329, 3
      // Predicated region
      $region105: #{srm_forward.3} parent=35 // pred_check
        %p331 = pneg %p330
      $region106: #{srm_forward.3} parent=35 // pred_check_branch
        %333 = sbr.rel (%p331) target = $region108
      $region107: #{srm_forward.3} parent=35 // pred_region
        %s334 = sadd.s32 %s204, 1
        %s335 = ssub.s32 1, %s216
        %s336 = smul.u32 %s334, 256
        %s337 = sadd.s32 %s336, 128
        %s338 = sshra.s32 %s337, 7
        %s339 = sand.u32 %s337, 127
        %s340 = smul.addr %s338, 8
        %s341 = scalar_lea.vmem %s0, %s340
        %s342 = smul.u32 %s335, 4
        %s343 = smul.addr %s342, 8
        %s344 = scalar_lea.vmem [#allocation2], %s343
        %s345 = scalar_lea.sflag [#allocation5], %s335
        %p347 = scmp.lt.u32.totalorder 32, 8
        %p348 = pneg %p347
        // Predicated region
        $region109: #{srm_forward.3} parent=107 // pred_check
          _
        $region110: #{srm_forward.3} parent=107 // pred_check_branch
          %350 = sbr.rel (%p347) target = $region112
        $region111: #{srm_forward.3} parent=107 // pred_region
          %s366 = sand.u32 32, 7
          %p367 = scmp.eq.s32.totalorder %s366, 0
          // Predicated region
          $region124: #{srm_forward.3} parent=111 // pred_check
            %p368 = pneg %p367
          $region125: #{srm_forward.3} parent=111 // pred_check_branch
            %370 = sbr.rel (%p368) target = $region127
          $region126: #{srm_forward.3} parent=111 // pred_region
            loop: start=0, step=1, limit=1
            $region128: #{srm_forward.3} parent=126 // loop_pre_header
              _
            $region129: #{srm_forward.3} parent=126 // loop_header
              %s372 = sphi 0, %s376
              %p373 = scmp.ge.s32.totalorder %s372, 1
              %s377 = sphi %s341, %s341
              %s378 = sphi %s344, %s344
            $region130: #{srm_forward.3} parent=126 // loop_header_branch
              %375 = sbr.rel (%p373) target = $region134
            $region131: #{srm_forward.3} parent=126 // loop_body
              %v379 = vld [vmem:[%s377] sm:$0xff]
              %380 = vst [vmem:[%s378] sm:$0xff] %v379
              %v381 = vld [vmem:[%s377 + $0x8] sm:$0xff]
              %382 = vst [vmem:[%s378 + $0x8] sm:$0xff] %v381
              %v383 = vld [vmem:[%s377 + $0x10] sm:$0xff]
              %384 = vst [vmem:[%s378 + $0x10] sm:$0xff] %v383
              %v385 = vld [vmem:[%s377 + $0x18] sm:$0xff]
              %386 = vst [vmem:[%s378 + $0x18] sm:$0xff] %v385
            $region132: #{srm_forward.3} parent=126 // loop_footer
              %s376 = sadd.s32 1, %s372
            $region133: #{srm_forward.3} parent=126 // loop_footer_branch
              %371 = sbr.rel target = $region129
            $region134: #{srm_forward.3} parent=126 // loop_exit
              _
          $region127: #{srm_forward.3} parent=111 // pred_fallthru
            _
          %p387 = pneg %p367
          // Predicated region
          $region135: #{srm_forward.3} parent=111 // pred_check
            _
          $region136: #{srm_forward.3} parent=111 // pred_check_branch
            %389 = sbr.rel (%p367) target = $region138
          $region137: #{srm_forward.3} parent=111 // pred_region
            %s390 = sand.u32 32, 7
          $region138: #{srm_forward.3} parent=111 // pred_fallthru
            _
        $region112: #{srm_forward.3} parent=107 // pred_fallthru
          _
        // Predicated region
        $region113: #{srm_forward.3} parent=107 // pred_check
          %p351 = pneg %p347
        $region114: #{srm_forward.3} parent=107 // pred_check_branch
          %353 = sbr.rel (%p351) target = $region116
        $region115: #{srm_forward.3} parent=107 // pred_region
          %s354 = sshll.u32 1, 32
          %s355 = ssub.s32 %s354, 1
          loop: start=0, step=1, limit=1
          $region117: #{srm_forward.3} parent=115 // loop_pre_header
            _
          $region118: #{srm_forward.3} parent=115 // loop_header
            %s357 = sphi 0, %s361
            %p358 = scmp.ge.s32.totalorder %s357, 1
            %s362 = sphi %s341, %s341
            %s363 = sphi %s344, %s344
          $region119: #{srm_forward.3} parent=115 // loop_header_branch
            %360 = sbr.rel (%p358) target = $region123
          $region120: #{srm_forward.3} parent=115 // loop_body
            %v364 = vld [vmem:[%s362] sm:%s355]
            %365 = vst [vmem:[%s363] sm:%s355] %v364
          $region121: #{srm_forward.3} parent=115 // loop_footer
            %s361 = sadd.s32 1, %s357
          $region122: #{srm_forward.3} parent=115 // loop_footer_branch
            %356 = sbr.rel target = $region118
          $region123: #{srm_forward.3} parent=115 // loop_exit
            _
        $region116: #{srm_forward.3} parent=107 // pred_fallthru
          _
        // Predicated region
        $region139: #{srm_forward.3} parent=107 // pred_check
          _
        $region140: #{srm_forward.3} parent=107 // pred_check_branch
          %393 = sbr.rel (0) target = $region142
        $region141: #{srm_forward.3} parent=107 // pred_region
          %394 = vsyncadd %s345, 512
        $region142: #{srm_forward.3} parent=107 // pred_fallthru
          _
        %s395 = scalar_lea.vmem %s1, %s338
        %s396 = scalar_lea.vmem [#allocation3], %s342
        %s397 = scalar_lea.sflag [#allocation6], %s335
        %p399 = scmp.lt.u32.totalorder 4, 8
        %p400 = pneg %p399
        // Predicated region
        $region143: #{srm_forward.3} parent=107 // pred_check
          _
        $region144: #{srm_forward.3} parent=107 // pred_check_branch
          %402 = sbr.rel (%p399) target = $region146
        $region145: #{srm_forward.3} parent=107 // pred_region
          %s418 = sand.u32 4, 7
          %p419 = scmp.eq.s32.totalorder %s418, 0
          %p420 = pneg %p419
          // Predicated region
          $region158: #{srm_forward.3} parent=145 // pred_check
            _
          $region159: #{srm_forward.3} parent=145 // pred_check_branch
            %422 = sbr.rel (%p419) target = $region161
          $region160: #{srm_forward.3} parent=145 // pred_region
            %s423 = sand.u32 4, 7
            %s424 = ssub.s32 4, %s423
            %s425 = scalar_lea.vmem %s395, %s424
            %s426 = ssub.s32 4, %s423
            %s427 = scalar_lea.vmem %s396, %s426 [#allocation3]
            %s428 = sshll.u32 1, %s423
            %s429 = ssub.s32 %s428, 1
            loop: start=0, step=1, limit=1
            $region162: #{srm_forward.3} parent=160 // loop_pre_header
              _
            $region163: #{srm_forward.3} parent=160 // loop_header
              %s431 = sphi 0, %s435
              %p432 = scmp.ge.s32.totalorder %s431, 1
              %s436 = sphi %s425, %s425
              %s437 = sphi %s427, %s427
            $region164: #{srm_forward.3} parent=160 // loop_header_branch
              %434 = sbr.rel (%p432) target = $region168
            $region165: #{srm_forward.3} parent=160 // loop_body
              %v438 = vld [vmem:[%s436] sm:%s429]
              %439 = vst [vmem:[%s437] sm:%s429] %v438
            $region166: #{srm_forward.3} parent=160 // loop_footer
              %s435 = sadd.s32 1, %s431
            $region167: #{srm_forward.3} parent=160 // loop_footer_branch
              %430 = sbr.rel target = $region163
            $region168: #{srm_forward.3} parent=160 // loop_exit
              _
          $region161: #{srm_forward.3} parent=145 // pred_fallthru
            _
        $region146: #{srm_forward.3} parent=107 // pred_fallthru
          _
        // Predicated region
        $region147: #{srm_forward.3} parent=107 // pred_check
          %p403 = pneg %p399
        $region148: #{srm_forward.3} parent=107 // pred_check_branch
          %405 = sbr.rel (%p403) target = $region150
        $region149: #{srm_forward.3} parent=107 // pred_region
          %s406 = sshll.u32 1, 4
          %s407 = ssub.s32 %s406, 1
          loop: start=0, step=1, limit=1
          $region151: #{srm_forward.3} parent=149 // loop_pre_header
            _
          $region152: #{srm_forward.3} parent=149 // loop_header
            %s409 = sphi 0, %s413
            %p410 = scmp.ge.s32.totalorder %s409, 1
            %s414 = sphi %s395, %s395
            %s415 = sphi %s396, %s396
          $region153: #{srm_forward.3} parent=149 // loop_header_branch
            %412 = sbr.rel (%p410) target = $region157
          $region154: #{srm_forward.3} parent=149 // loop_body
            %v416 = vld [vmem:[%s414] sm:%s407]
            %417 = vst [vmem:[%s415] sm:%s407] %v416
          $region155: #{srm_forward.3} parent=149 // loop_footer
            %s413 = sadd.s32 1, %s409
          $region156: #{srm_forward.3} parent=149 // loop_footer_branch
            %408 = sbr.rel target = $region152
          $region157: #{srm_forward.3} parent=149 // loop_exit
            _
        $region150: #{srm_forward.3} parent=107 // pred_fallthru
          _
        // Predicated region
        $region169: #{srm_forward.3} parent=107 // pred_check
          _
        $region170: #{srm_forward.3} parent=107 // pred_check_branch
          %442 = sbr.rel (0) target = $region172
        $region171: #{srm_forward.3} parent=107 // pred_region
          %443 = vsyncadd %s397, 64
        $region172: #{srm_forward.3} parent=107 // pred_fallthru
          _
      $region108: #{srm_forward.3} parent=35 // pred_fallthru
        _
      %s444 = smul.u32 %s204, 256
      %s445 = sadd.s32 %s444, 128
      %s446 = smul.u32 %s216, 4
      %s447 = smul.addr %s446, 8
      %s448 = scalar_lea.vmem [#allocation2], %s447
      %s449 = scalar_lea.sflag [#allocation5], %s216
      %s450 = smul.u32 8, 1
      %s451 = smul.u32 %s450, 4
      %s452 = sshll.u32 %s451, 4
      %453 = dma.done %s449, %s452
      %s454 = scalar_lea.vmem [#allocation3], %s446
      %s455 = scalar_lea.sflag [#allocation6], %s216
      %s456 = smul.u32 1, 4
      %s457 = sshll.u32 %s456, 4
      %458 = dma.done %s455, %s457
      %v459 = vld [vmem:[%s448] sm:$0xff]
      %v460 = vld [vmem:[%s448 + $0x8] sm:$0xff]
      %v461 = vld [vmem:[%s448 + $0x10] sm:$0xff]
      %v462 = vld [vmem:[%s448 + $0x18] sm:$0xff]
      %v463 = vld [vmem:[%s454] sm:$0xf]
      %vm464 = vcmp.gt.f32.partialorder %v463, 0.5
      %v465 = vld [vmem:[%s4] sm:$0xff]
      %467 = vset.pattern.permute.xlu0 0
      %468 = vperm.xlu0 %467, %v465
      %v469 = vpop.permute.xlu0 %468
      %v471 = vmul.f32 %v459, %v469
      %v472 = vmul.f32 %v460, %v469
      %v473 = vmul.f32 %v461, %v469
      %v474 = vmul.f32 %v462, %v469
      %v475 = vld [vmem:[%s5] sm:$0xff]
      %477 = vset.pattern.permute.xlu0 0
      %478 = vperm.xlu0 %477, %v475
      %v479 = vpop.permute.xlu0 %478
      %v481 = vadd.f32 %v471, %v479
      %v482 = vadd.f32 %v472, %v479
      %v483 = vadd.f32 %v473, %v479
      %v484 = vadd.f32 %v474, %v479
      %v485 = vmax.f32 %v481, 0.0
      %v486 = vmax.f32 %v482, 0.0
      %v487 = vmax.f32 %v483, 0.0
      %v488 = vmax.f32 %v484, 0.0
      %v489 = vsel %vm464, 1, 0
      %v490 = vlaneseq
      %v491 = vshrl.u32 %v490, 7
      %v492 = vsub.s32 0, %v491
      %v493 = vrot.slane %v489, %v492
      %v494 = vlaneseq
      %v495 = vshrl.u32 %v494, 7
      %v496 = vsub.s32 1, %v495
      %v497 = vrot.slane %v489, %v496
      %v498 = vlaneseq
      %v499 = vshrl.u32 %v498, 7
      %v500 = vsub.s32 2, %v499
      %v501 = vrot.slane %v489, %v500
      %v502 = vlaneseq
      %v503 = vshrl.u32 %v502, 7
      %v504 = vsub.s32 3, %v503
      %v505 = vrot.slane %v489, %v504
      %vm506 = vcmp.eq.s32.totalorder %v493, 1
      %vm507 = vcmp.eq.s32.totalorder %v497, 1
      %vm508 = vcmp.eq.s32.totalorder %v501, 1
      %vm509 = vcmp.eq.s32.totalorder %v505, 1
      %v510 = vsel %vm506, %v485, 0.0
      %v511 = vsel %vm507, %v486, 0.0
      %v512 = vsel %vm508, %v487, 0.0
      %v513 = vsel %vm509, %v488, 0.0
      %517 = vrot.lane.b32.xlu0 %v510, 19
      %v518 = vpop.permute.xlu0 %517
      %519 = vrot.lane.b32.xlu0 %v511, 19
      %v520 = vpop.permute.xlu0 %519
      %521 = vrot.lane.b32.xlu0 %v512, 19
      %v522 = vpop.permute.xlu0 %521
      %vm523 = vcmask 154624
      %v524 = vsel %vm523, %v518, %v520
      %v525 = vsel %vm523, %v520, %v522
      %528 = vst [vmem:[#allocation4] sm:$0xff] %v524
      %529 = vst [vmem:[#allocation4 + $0x8] sm:$0xff] %v525
      %530 = vrot.lane.b32.xlu0 %v510, 18
      %v531 = vpop.permute.xlu0 %530
      %532 = vrot.lane.b32.xlu0 %v511, 18
      %v533 = vpop.permute.xlu0 %532
      %534 = vrot.lane.b32.xlu0 %v512, 18
      %v535 = vpop.permute.xlu0 %534
      %vm536 = vcmask 146432
      %v537 = vsel %vm536, %v531, %v533
      %v538 = vsel %vm536, %v533, %v535
      %541 = vst [vmem:[#allocation4 + $0x10] sm:$0xff] %v537
      %542 = vst [vmem:[#allocation4 + $0x18] sm:$0xff] %v538
      %543 = vrot.lane.b32.xlu0 %v510, 17
      %v544 = vpop.permute.xlu0 %543
      %545 = vrot.lane.b32.xlu0 %v511, 17
      %v546 = vpop.permute.xlu0 %545
      %547 = vrot.lane.b32.xlu0 %v512, 17
      %v548 = vpop.permute.xlu0 %547
      %vm549 = vcmask 138240
      %v550 = vsel %vm549, %v544, %v546
      %v551 = vsel %vm549, %v546, %v548
      %554 = vst [vmem:[#allocation4 + $0x20] sm:$0xff] %v550
      %555 = vst [vmem:[#allocation4 + $0x28] sm:$0xff] %v551
      %556 = vrot.lane.b32.xlu0 %v510, 1
      %v557 = vpop.permute.xlu0 %556
      %558 = vrot.lane.b32.xlu0 %v511, 1
      %v559 = vpop.permute.xlu0 %558
      %560 = vrot.lane.b32.xlu0 %v512, 1
      %v561 = vpop.permute.xlu0 %560
      %vm562 = vcmask 7168
      %v563 = vsel %vm562, %v557, %v559
      %v564 = vsel %vm562, %v559, %v561
      %567 = vst [vmem:[#allocation4 + $0x30] sm:$0xff] %v563
      %568 = vst [vmem:[#allocation4 + $0x38] sm:$0xff] %v564
      %569 = vst [vmem:[#allocation4 + $0x40] sm:$0xff] %v511
      %570 = vst [vmem:[#allocation4 + $0x48] sm:$0xff] %v512
      %572 = vrot.lane.b32.xlu0 %v511, 127
      %v573 = vpop.permute.xlu0 %572
      %574 = vrot.lane.b32.xlu0 %v512, 127
      %v575 = vpop.permute.xlu0 %574
      %576 = vrot.lane.b32.xlu0 %v513, 127
      %v577 = vpop.permute.xlu0 %576
      %vm578 = vcmask 1039360
      %v579 = vsel %vm578, %v573, %v575
      %v580 = vsel %vm578, %v575, %v577
      %583 = vst [vmem:[#allocation4 + $0x50] sm:$0xff] %v579
      %584 = vst [vmem:[#allocation4 + $0x58] sm:$0xff] %v580
      %585 = vrot.lane.b32.xlu0 %v511, 111
      %v586 = vpop.permute.xlu0 %585
      %587 = vrot.lane.b32.xlu0 %v512, 111
      %v588 = vpop.permute.xlu0 %587
      %589 = vrot.lane.b32.xlu0 %v513, 111
      %v590 = vpop.permute.xlu0 %589
      %vm591 = vcmask 908288
      %v592 = vsel %vm591, %v586, %v588
      %v593 = vsel %vm591, %v588, %v590
      %596 = vst [vmem:[#allocation4 + $0x60] sm:$0xff] %v592
      %597 = vst [vmem:[#allocation4 + $0x68] sm:$0xff] %v593
      %598 = vrot.lane.b32.xlu0 %v511, 110
      %v599 = vpop.permute.xlu0 %598
      %600 = vrot.lane.b32.xlu0 %v512, 110
      %v601 = vpop.permute.xlu0 %600
      %602 = vrot.lane.b32.xlu0 %v513, 110
      %v603 = vpop.permute.xlu0 %602
      %vm604 = vcmask 900096
      %v605 = vsel %vm604, %v599, %v601
      %v606 = vsel %vm604, %v601, %v603
      %609 = vst [vmem:[#allocation4 + $0x70] sm:$0xff] %v605
      %610 = vst [vmem:[#allocation4 + $0x78] sm:$0xff] %v606
      %611 = vrot.lane.b32.xlu0 %v511, 109
      %v612 = vpop.permute.xlu0 %611
      %613 = vrot.lane.b32.xlu0 %v512, 109
      %v614 = vpop.permute.xlu0 %613
      %615 = vrot.lane.b32.xlu0 %v513, 109
      %v616 = vpop.permute.xlu0 %615
      %vm617 = vcmask 891904
      %v618 = vsel %vm617, %v612, %v614
      %v619 = vsel %vm617, %v614, %v616
      %622 = vst [vmem:[#allocation4 + $0x80] sm:$0xff] %v618
      %623 = vst [vmem:[#allocation4 + $0x88] sm:$0xff] %v619
      %v624 = vld [vmem:[%s2] sm:$0xff]
      %v625 = vld [vmem:[%s2 + $0x8] sm:$0xff]
      %v626 = vld [vmem:[#allocation4] sm:$0xff]
      %v627 = vld [vmem:[#allocation4 + $0x8] sm:$0xff]
      %v628 = vld [vmem:[#allocation4 + $0x10] sm:$0xff]
      %v629 = vld [vmem:[#allocation4 + $0x18] sm:$0xff]
      %v630 = vld [vmem:[#allocation4 + $0x20] sm:$0xff]
      %v631 = vld [vmem:[#allocation4 + $0x28] sm:$0xff]
      %v632 = vld [vmem:[#allocation4 + $0x30] sm:$0xff]
      %v633 = vld [vmem:[#allocation4 + $0x38] sm:$0xff]
      %v634 = vld [vmem:[#allocation4 + $0x40] sm:$0xff]
      %v635 = vld [vmem:[#allocation4 + $0x48] sm:$0xff]
      %v636 = vld [vmem:[#allocation4 + $0x50] sm:$0xff]
      %v637 = vld [vmem:[#allocation4 + $0x58] sm:$0xff]
      %v638 = vld [vmem:[#allocation4 + $0x60] sm:$0xff]
      %v639 = vld [vmem:[#allocation4 + $0x68] sm:$0xff]
      %v640 = vld [vmem:[#allocation4 + $0x70] sm:$0xff]
      %v641 = vld [vmem:[#allocation4 + $0x78] sm:$0xff]
      %v642 = vld [vmem:[#allocation4 + $0x80] sm:$0xff]
      %v643 = vld [vmem:[#allocation4 + $0x88] sm:$0xff]
      %v644 = vld [vmem:[%s3] sm:$0xff]
      %v645 = vld [vmem:[%s3 + $0x8] sm:$0xff]
      %647 = vset.pattern.permute.xlu0 0
      %648 = vperm.xlu0 %647, %v644
      %v649 = vpop.permute.xlu0 %648
      %652 = vset.pattern.permute.xlu0 0
      %653 = vperm.xlu0 %652, %v645
      %v654 = vpop.permute.xlu0 %653
      %vm656 = vcmask 588800
      %v658 = vsel %vm656, %v624, 0
      %v661 = vsel %vm656, %v625, 0
      %663 = vmatprep.subr.mxu0 0.0
      %664 = vmatpush1.msra.mxu0 0.0
      %665 = vmatprep.subr.mxu0 0.0
      %666 = vmatpush1.msra.mxu0 0.0
      %667 = vmatprep.subr.mxu0 0.0
      %668 = vmatpush1.msra.mxu0 0.0
      %669 = vmatprep.subr.mxu0 0.0
      %670 = vmatpush1.msra.mxu0 0.0
      %671 = vmatprep.subr.mxu0 0.0
      %672 = vmatpush1.msra.mxu0 0.0
      %673 = vmatprep.subr.mxu0 0.0
      %674 = vmatpush1.msra.mxu0 0.0
      %675 = vmatprep.subr.mxu0 0.0
      %676 = vmatpush1.msra.mxu0 0.0
      %677 = vmatprep.subr.mxu0 %v643
      %678 = vmatpush1.msra.mxu0 %v642
      %679 = vmatprep.subr.mxu0 %v641
      %680 = vmatpush1.msra.mxu0 %v640
      %681 = vmatprep.subr.mxu0 %v639
      %682 = vmatpush1.msra.mxu0 %v638
      %683 = vmatprep.subr.mxu0 %v637
      %684 = vmatpush1.msra.mxu0 %v636
      %685 = vmatprep.subr.mxu0 %v635
      %686 = vmatpush1.msra.mxu0 %v634
      %687 = vmatprep.subr.mxu0 %v633
      %688 = vmatpush1.msra.mxu0 %v632
      %689 = vmatprep.subr.mxu0 %v631
      %690 = vmatpush1.msra.mxu0 %v630
      %691 = vmatprep.subr.mxu0 %v629
      %692 = vmatpush1.msra.mxu0 %v628
      %693 = vmatprep.subr.mxu0 %v627
      %694 = vmatpush1.msra.mxu0 %v626
      %695 = vmatprep.subr.mxu0 0.0
      %696 = vmatpush2.msra.mxu0 0.0
      %697 = vmatprep.subr.mxu0 0.0
      %698 = vmatpush2.msra.mxu0 0.0
      %699 = vmatprep.subr.mxu0 0.0
      %700 = vmatpush2.msra.mxu0 0.0
      %701 = vmatprep.subr.mxu0 0.0
      %702 = vmatpush2.msra.mxu0 0.0
      %703 = vmatprep.subr.mxu0 0.0
      %704 = vmatpush2.msra.mxu0 0.0
      %705 = vmatprep.subr.mxu0 0.0
      %706 = vmatpush2.msra.mxu0 0.0
      %707 = vmatprep.subr.mxu0 0.0
      %708 = vmatpush2.msra.mxu0 0.0
      %709 = vmatprep.subr.mxu0 0.0
      %710 = vmatpush2.msra.mxu0 0.0
      %711 = vmatprep.subr.mxu0 0.0
      %712 = vmatpush2.msra.mxu0 0.0
      %713 = vmatprep.subr.mxu0 0.0
      %714 = vmatpush2.msra.mxu0 0.0
      %715 = vmatprep.subr.mxu0 0.0
      %716 = vmatpush2.msra.mxu0 0.0
      %717 = vmatprep.subr.mxu0 0.0
      %718 = vmatpush2.msra.mxu0 0.0
      %719 = vmatprep.subr.mxu0 0.0
      %720 = vmatpush2.msra.mxu0 0.0
      %721 = vmatprep.subr.mxu0 0.0
      %722 = vmatpush2.msra.mxu0 0.0
      %723 = vmatprep.subr.mxu0 0.0
      %724 = vmatpush2.msra.mxu0 0.0
      %725 = vmatprep.subr.mxu0 0.0
      %726 = vmatpush2.msra.mxu0 0.0
      %727 = vmatprep.mubr.f32.mxu0 0.0
      %728 = vmatmul.mubr.f32.gmra.mxu0 %v658
      %v729 = vpop.f32.mrf.mxu0
      %v730 = vadd.f32 %v649, %v729
      %v731 = vpop.f32.mrf.mxu0
      %v732 = vadd.f32 %v649, %v731
      %733 = vmatprep.mubr.f32.mxu0 0.0
      %734 = vmatmul.mubr.f32.gmra.mxu0 %v661
      %v735 = vpop.f32.mrf.mxu0
      %v736 = vadd.f32 %v654, %v735
      %v737 = vpop.f32.mrf.mxu0
      %v738 = vadd.f32 %v654, %v737
      %739 = vdwg.mxu0
      %v740 = vmul.f32 %v730, %v511
      %v741 = vmul.f32 %v732, %v512
      %v742 = vadd.f32 %v740, %v736
      %v743 = vadd.f32 %v741, %v738
      %v744 = vmax.f32 %v742, 0.0
      %v745 = vmax.f32 %v743, 0.0
      %746 = vst [vmem:[%s199] sm:$0xff] %v744
      %747 = vst [vmem:[%s199 + $0x8] sm:$0xff] %v745
      %s748 = smul.u32 %s21, 3
      %s749 = sadd.s32 %s748, %s22
      %s750 = smul.u32 2, %s749
      %p751 = scmp.lt.s32.totalorder %s750, 5
      %s752 = scalar_select %p751, %s750, 5
      %s753 = smul.addr %s752, 8
      %s754 = scalar_lea.vmem %s6, %s753
      // Predicated region
      $region173: #{srm_forward.3} parent=35 // pred_check
        %p755 = pneg %p135
      $region174: #{srm_forward.3} parent=35 // pred_check_branch
        %757 = sbr.rel (%p755) target = $region176
      $region175: #{srm_forward.3} parent=35 // pred_region
        %s758 = smul.u32 %s21, 3
        %s759 = sadd.s32 %s758, %s22
        %s760 = smul.u32 2, %s759
      $region176: #{srm_forward.3} parent=35 // pred_fallthru
        _
    $region36: #{srm_forward.3} parent=5 // pred_fallthru
      _
    %p761 = scmp.le.s32.totalorder 2, %s12
    // Predicated region
    $region177: #{srm_forward.3} parent=5 // pred_check
      %p762 = pneg %p761
    $region178: #{srm_forward.3} parent=5 // pred_check_branch
      %764 = sbr.rel (%p762) target = $region180
    $region179: #{srm_forward.3} parent=5 // pred_region
      %s765 = ssub.s32 %s12, 2
      // Predicated region
      $region181: #{srm_forward.3} parent=179 // pred_check
        %p766 = pneg %p141
      $region182: #{srm_forward.3} parent=179 // pred_check_branch
        %768 = sbr.rel (%p766) target = $region184
      $region183: #{srm_forward.3} parent=179 // pred_region
        %s769 = smul.u32 %s23, 3
        %s770 = sadd.s32 %s769, %s24
        %s771 = smul.u32 2, %s770
        %p772 = scmp.lt.s32.totalorder %s771, 5
        %s773 = scalar_select %p772, %s771, 5
        %s774 = smul.addr %s773, 8
        %s775 = scalar_lea.vmem %s6, %s774
      $region184: #{srm_forward.3} parent=179 // pred_fallthru
        _
    $region180: #{srm_forward.3} parent=5 // pred_fallthru
      _
  $region6: #{srm_forward.3} parent=0 // loop_footer
    %s16 = sadd.s32 1, %s12
  $region7: #{srm_forward.3} parent=0 // loop_footer_branch
    %11 = sbr.rel target = $region3
  $region8: #{srm_forward.3} parent=0 // loop_exit
    _
  %776 = vsyncmov [#allocation5]
  %s777 = vpop.sfrf %776
  %p778 = scmp.eq.s32.totalorder %s777, 0
  %p779 = pneg %p778
  %781 = shalt.err (%p779)
  %s782 = scalar_lea.sflag [#allocation5], 1
  %783 = vsyncmov %s782
  %s784 = vpop.sfrf %783
  %p785 = scmp.eq.s32.totalorder %s784, 0
  %p786 = pneg %p785
  %788 = shalt.err (%p786)
  %789 = vsyncmov [#allocation6]
  %s790 = vpop.sfrf %789
  %p791 = scmp.eq.s32.totalorder %s790, 0
  %p792 = pneg %p791
  %794 = shalt.err (%p792)
  %s795 = scalar_lea.sflag [#allocation6], 1
  %796 = vsyncmov %s795
  %s797 = vpop.sfrf %796
  %p798 = scmp.eq.s32.totalorder %s797, 0
  %p799 = pneg %p798
  %801 = shalt.err (%p799)

</llo_original>
